<compile_context>
chip_gen: v6e
topology: v6e:2x2x1
jax: 0.10.0
libtpu: 0.0.40
codegen_flags: <defaults>
</compile_context>

<pallas_src>
import functools

import jax
import jax.numpy as jnp
from jax.experimental import pallas as pl
from jax.experimental.pallas import tpu as pltpu


def _mixnet_head_kernel(x_ref, wh_ref, shift_ref, wc_ref, bc_ref, o_ref,
                        pooled_ref, *, tb, hw_pad, chunk):
    # One grid step = TB images.
    # x_ref     : (TB*HW_pad, C_in)  bf16  channels-last rows (HW zero-padded)
    # wh_ref    : (C_in, C_out)      bf16  conv_head weight, BN scale folded in
    # shift_ref : (1, C_out)         f32   folded BN shift = beta - mean*scale
    # wc_ref    : (C_out, NC_pad)    f32   classifier weight, 1/HW folded, lane-padded
    # bc_ref    : (1, NC_pad)        f32   classifier bias + HW-pad correction
    # o_ref     : (TB, NC_pad)       f32   logits
    # pooled_ref: (TB, C_out)        f32   scratch: per-image pooled sums
    shift = shift_ref[...]                                       # load once, reuse
    rows = chunk * hw_pad
    # Static unroll over image chunks: the live f32 intermediate is one chunk,
    # pool accumulates into VMEM scratch, MXU drain overlaps the VPU epilogue.
    for c in range(tb // chunk):
        xc = x_ref[pl.ds(c * rows, rows), :]                     # (rows, C_in) bf16
        y = jnp.dot(xc, wh_ref[...],
                    preferred_element_type=jnp.float32)          # (rows, C_out) f32
        y = jnp.maximum(y + shift, 0.0)                          # bn2 shift + ReLU
        # rows = chunk*hw_pad with hw_pad % 8 == 0: sublane-only split (free view)
        p = jnp.sum(y.reshape(chunk, hw_pad, y.shape[-1]), axis=1)   # (chunk, C_out)
        pooled_ref[pl.ds(c * chunk, chunk), :] = p
    # Classifier for the whole tile in f32 (tiny matmul; 1/HW already folded
    # into wc, zero-padded-row correction already folded into bc).
    o_ref[...] = (jnp.dot(pooled_ref[...], wc_ref[...],
                          preferred_element_type=jnp.float32) + bc_ref[...])


def fold_mixnet_head_params(w_head, gamma, beta, run_mean, run_var,
                            w_cls, b_cls, *, hw, eps=1e-5):
    """One-time (per-model) constant folding — call once, reuse every forward."""
    C_out, C_in = w_head.shape[0], w_head.shape[1]
    NC = w_cls.shape[0]
    NC_pad = pl.cdiv(NC, 128) * 128           # lane-dense output (unmasked stores)
    hw_pad = pl.cdiv(hw, 8) * 8               # e.g. real mixnet_l 7x7: 49 -> 56

    scale = gamma / jnp.sqrt(run_var + eps)                               # (C_out,)
    shift = (beta - run_mean * scale).reshape(1, C_out).astype(jnp.float32)
    wh = (w_head.reshape(C_out, C_in) * scale[:, None]).T                 # (C_in, C_out)
    wh = wh.astype(jnp.bfloat16)

    # Pooling runs in-kernel as a SUM over hw_pad rows: fold 1/hw into the
    # classifier weight, and fold the zero-padded rows' ReLU(shift) contribution
    # into the classifier bias so the kernel needs no HW mask.
    wc = jnp.pad(w_cls.T, ((0, 0), (0, NC_pad - NC))).astype(jnp.float32) / hw
    bc = jnp.pad(b_cls, (0, NC_pad - NC)).reshape(1, NC_pad).astype(jnp.float32)
    pad_rows = hw_pad - hw
    if pad_rows:
        bc = bc - (pad_rows * jnp.maximum(shift, 0.0)) @ wc               # (1, NC_pad)

    return dict(wh=wh, shift=shift, wc=wc, bc=bc,
                hw=hw, hw_pad=hw_pad, num_class=NC, nc_pad=NC_pad)


def mixnet_head_forward(x_nhwc, params, *, tile_batch=32):
    """x_nhwc: (N, H, W, 264) channels-last feature map entering conv_head."""
    wh, shift, wc, bc = params["wh"], params["shift"], params["wc"], params["bc"]
    hw, hw_pad = params["hw"], params["hw_pad"]
    NC, NC_pad = params["num_class"], params["nc_pad"]
    N, H, W, C_in = x_nhwc.shape
    assert H * W == hw, "params were folded for a different spatial size"
    C_out = wh.shape[1]

    # TB: multiple of 8, <= tile_batch, and grid >= 2 when possible so the
    # "parallel" grid axis shards across both v7x TensorCores.
    tile_batch = max(8, (tile_batch // 8) * 8)
    TB = max(8, min(tile_batch, 8 * pl.cdiv(N, 16)))
    N_pad = pl.cdiv(N, TB) * TB
    chunk = 8                     # images per in-kernel epilogue chunk

    # Activation prep (pad HW to sublane multiple + batch to TB multiple, bf16);
    # allow_input_fusion lets XLA fuse this into the kernel's input DMA.
    x = x_nhwc.reshape(N, hw, C_in).astype(jnp.bfloat16)
    x = jnp.pad(x, ((0, N_pad - N), (0, hw_pad - hw), (0, 0)))
    x = x.reshape(N_pad * hw_pad, C_in)

    kernel = functools.partial(_mixnet_head_kernel, tb=TB, hw_pad=hw_pad, chunk=chunk)

    out = pl.pallas_call(
        kernel,
        out_shape=jax.ShapeDtypeStruct((N_pad, NC_pad), jnp.float32),
        grid_spec=pltpu.PrefetchScalarGridSpec(
            num_scalar_prefetch=0,
            grid=(N_pad // TB,),
            in_specs=[
                pl.BlockSpec((TB * hw_pad, C_in), lambda t: (t, 0)),   # activations
                pl.BlockSpec((C_in, C_out), lambda t: (0, 0)),          # wh (grid-invariant)
                pl.BlockSpec((1, C_out), lambda t: (0, 0)),             # shift
                pl.BlockSpec((C_out, NC_pad), lambda t: (0, 0)),        # wc
                pl.BlockSpec((1, NC_pad), lambda t: (0, 0)),            # bc
            ],
            out_specs=pl.BlockSpec((TB, NC_pad), lambda t: (t, 0)),
            scratch_shapes=[pltpu.VMEM((TB, C_out), jnp.float32)],      # pooled acc
        ),
        compiler_params=pltpu.CompilerParams(
            dimension_semantics=("parallel",),
            allow_input_fusion=[True, False, False, False, False],
        ),
    )(x, wh, shift, wc, bc)

    # Drop batch padding and lane padding (padded images/lanes never used).
    return out[:N, :NC]


def _reference(x_nhwc, w_head, gamma, beta, run_mean, run_var, w_cls, b_cls, eps=1e-5):
    # plain-JAX f32 reference of the same head path (for correctness check)
    C_out, C_in = w_head.shape[0], w_head.shape[1]
    y = jnp.einsum("nhwc,oc->nhwo", x_nhwc, w_head.reshape(C_out, C_in))
    y = (y - run_mean) * (gamma / jnp.sqrt(run_var + eps)) + beta
    y = jnp.maximum(y, 0.0)
    pooled = jnp.mean(y, axis=(1, 2))                       # (N, C_out)
    return pooled @ w_cls.T + b_cls[None, :]


if __name__ == "__main__":
    # mixnet_l head sizes: indim=264, outdim=512, num_class=2.
    # Real mixnet_l final map at 224px input is 7x7 (HW=49) — exercises the
    # HW-pad (49 -> 56) + folded bias-correction path. 16 images -> grid of 2.
    N, C_IN, H, W = 16, 264, 7, 7
    C_OUT, NUM_CLASS = 512, 2

    key = jax.random.PRNGKey(0)
    k = jax.random.split(key, 7)
    x_nhwc = jax.random.normal(k[0], (N, H, W, C_IN), jnp.float32)
    w_head = jax.random.normal(k[1], (C_OUT, C_IN, 1, 1), jnp.float32) * 0.02
    gamma = jnp.abs(jax.random.normal(k[2], (C_OUT,), jnp.float32)) + 0.5
    beta = jax.random.normal(k[3], (C_OUT,), jnp.float32) * 0.1
    run_mean = jax.random.normal(k[4], (C_OUT,), jnp.float32) * 0.05
    run_var = jnp.abs(jax.random.normal(k[5], (C_OUT,), jnp.float32)) + 1.0
    # NOTE: original code keeps timm's 1536-in classifier which would mismatch
    # the replaced 512-ch conv_head; we use the evidently intended Linear(512->nc).
    w_cls = jax.random.normal(k[6], (NUM_CLASS, C_OUT), jnp.float32) * 0.02
    b_cls = jnp.zeros((NUM_CLASS,), jnp.float32)

    # One-time constant folding, hoisted out of the forward path.
    params = fold_mixnet_head_params(w_head, gamma, beta, run_mean, run_var,
                                     w_cls, b_cls, hw=H * W)
    fwd = jax.jit(functools.partial(mixnet_head_forward, params=params, tile_batch=8))

    out = jax.block_until_ready(fwd(x_nhwc))

    ref = _reference(x_nhwc, w_head, gamma, beta, run_mean, run_var, w_cls, b_cls)
    assert out.shape == (N, NUM_CLASS)
    # bf16 activations / conv weight with f32 accumulation: bf16-level tolerance.
    assert jnp.allclose(out, ref, atol=2e-2, rtol=2e-2), (out, ref)
    print("KERNEL_OK")
</pallas_src>

<mosaic_0001>
module attributes {stable_mosaic.version = 11 : i64} {
  func.func @_mixnet_head_kernel(%arg0: i32, %arg1: memref<448x264xbf16, #tpu.memory_space<vmem>>, %arg2: memref<264x512xbf16, #tpu.memory_space<vmem>>, %arg3: memref<1x512xf32, #tpu.memory_space<vmem>>, %arg4: memref<512x128xf32, #tpu.memory_space<vmem>>, %arg5: memref<1x128xf32, #tpu.memory_space<vmem>>, %arg6: memref<8x128xf32, #tpu.memory_space<vmem>>, %arg7: memref<8x512xf32, #tpu.memory_space<vmem>>) attributes {dimension_semantics = [#tpu.dimension_semantics<parallel>], iteration_bounds = array<i64: 2>, scalar_prefetch = 0 : i64, scratch_operands = 1 : i64, tpu.core_type = #tpu.core_type<tc>, window_params = [{transform_indices = @transform_0, window_bounds = array<i64: 448, 264>}, {pipeline_mode = #tpu.pipeline_mode<synchronous>, transform_indices = @transform_1, window_bounds = array<i64: 264, 512>}, {pipeline_mode = #tpu.pipeline_mode<synchronous>, transform_indices = @transform_2, window_bounds = array<i64: 1, 512>}, {pipeline_mode = #tpu.pipeline_mode<synchronous>, transform_indices = @transform_3, window_bounds = array<i64: 512, 128>}, {pipeline_mode = #tpu.pipeline_mode<synchronous>, transform_indices = @transform_4, window_bounds = array<i64: 1, 128>}, {transform_indices = @transform_5, window_bounds = array<i64: 8, 128>}]} {
    %c0 = arith.constant 0 : index
    %c0_0 = arith.constant 0 : index
    %0 = vector.load %arg3[%c0, %c0_0] : memref<1x512xf32, #tpu.memory_space<vmem>>, vector<1x512xf32>
    %c0_1 = arith.constant 0 : index
    %c0_2 = arith.constant 0 : index
    %1 = vector.load %arg1[%c0_1, %c0_2] : memref<448x264xbf16, #tpu.memory_space<vmem>>, vector<448x264xbf16>
    %c0_3 = arith.constant 0 : index
    %c0_4 = arith.constant 0 : index
    %2 = vector.load %arg2[%c0_3, %c0_4] : memref<264x512xbf16, #tpu.memory_space<vmem>>, vector<264x512xbf16>
    %cst = arith.constant dense<0.000000e+00> : vector<448x512xf32>
    %3 = tpu.matmul %1, %2, %cst {dimension_numbers = #tpu.dot_dimension_numbers<[1], [0], [0], [1], [0, 0, 1, 1], [], []>} : vector<448x264xbf16>, vector<264x512xbf16>, vector<448x512xf32> -> vector<448x512xf32>
    %4 = vector.broadcast %0 : vector<1x512xf32> to vector<448x512xf32>
    %5 = arith.addf %3, %4 : vector<448x512xf32>
    %cst_5 = arith.constant 0.000000e+00 : f32
    %6 = vector.broadcast %cst_5 : f32 to vector<448x512xf32>
    %7 = arith.maximumf %5, %6 : vector<448x512xf32>
    %8 = vector.shape_cast %7 : vector<448x512xf32> to vector<8x56x512xf32>
    %cst_6 = arith.constant dense<0.000000e+00> : vector<8x512xf32>
    %9 = vector.multi_reduction <add>, %8, %cst_6 [1] : vector<8x56x512xf32> to vector<8x512xf32>
    %c0_7 = arith.constant 0 : index
    %c0_8 = arith.constant 0 : index
    %10 = vector.load %arg7[%c0_7, %c0_8] : memref<8x512xf32, #tpu.memory_space<vmem>>, vector<8x512xf32>
    tpu.vector_store %arg7[%c0_7, %c0_8], %9 {strides = array<i32>} : memref<8x512xf32, #tpu.memory_space<vmem>>, vector<8x512xf32>,
    %c0_9 = arith.constant 0 : index
    %c0_10 = arith.constant 0 : index
    %11 = vector.load %arg7[%c0_9, %c0_10] : memref<8x512xf32, #tpu.memory_space<vmem>>, vector<8x512xf32>
    %c0_11 = arith.constant 0 : index
    %c0_12 = arith.constant 0 : index
    %12 = vector.load %arg4[%c0_11, %c0_12] : memref<512x128xf32, #tpu.memory_space<vmem>>, vector<512x128xf32>
    %cst_13 = arith.constant dense<0.000000e+00> : vector<8x128xf32>
    %13 = tpu.matmul %11, %12, %cst_13 {dimension_numbers = #tpu.dot_dimension_numbers<[1], [0], [0], [1], [0, 0, 1, 1], [], []>} : vector<8x512xf32>, vector<512x128xf32>, vector<8x128xf32> -> vector<8x128xf32>
    %c0_14 = arith.constant 0 : index
    %c0_15 = arith.constant 0 : index
    %14 = vector.load %arg5[%c0_14, %c0_15] : memref<1x128xf32, #tpu.memory_space<vmem>>, vector<1x128xf32>
    %15 = vector.broadcast %14 : vector<1x128xf32> to vector<8x128xf32>
    %16 = arith.addf %13, %15 : vector<8x128xf32>
    %c0_16 = arith.constant 0 : index
    %c0_17 = arith.constant 0 : index
    %17 = vector.load %arg6[%c0_16, %c0_17] : memref<8x128xf32, #tpu.memory_space<vmem>>, vector<8x128xf32>
    tpu.vector_store %arg6[%c0_16, %c0_17], %16 {strides = array<i32>} : memref<8x128xf32, #tpu.memory_space<vmem>>, vector<8x128xf32>,
    return
  }
  func.func @transform_0(%arg0: i32) -> (i32, i32) {
    %c0_i32 = arith.constant 0 : i32
    %c0_i32_0 = arith.constant 0 : i32
    return %arg0, %c0_i32 : i32, i32
  }
  func.func @transform_1(%arg0: i32) -> (i32, i32) {
    %c0_i32 = arith.constant 0 : i32
    %c0_i32_0 = arith.constant 0 : i32
    %c0_i32_1 = arith.constant 0 : i32
    return %c0_i32, %c0_i32_0 : i32, i32
  }
  func.func @transform_2(%arg0: i32) -> (i32, i32) {
    %c0_i32 = arith.constant 0 : i32
    %c0_i32_0 = arith.constant 0 : i32
    %c0_i32_1 = arith.constant 0 : i32
    return %c0_i32, %c0_i32_0 : i32, i32
  }
  func.func @transform_3(%arg0: i32) -> (i32, i32) {
    %c0_i32 = arith.constant 0 : i32
    %c0_i32_0 = arith.constant 0 : i32
    %c0_i32_1 = arith.constant 0 : i32
    return %c0_i32, %c0_i32_0 : i32, i32
  }
  func.func @transform_4(%arg0: i32) -> (i32, i32) {
    %c0_i32 = arith.constant 0 : i32
    %c0_i32_0 = arith.constant 0 : i32
    %c0_i32_1 = arith.constant 0 : i32
    return %c0_i32, %c0_i32_0 : i32, i32
  }
  func.func @transform_5(%arg0: i32) -> (i32, i32) {
    %c0_i32 = arith.constant 0 : i32
    %c0_i32_0 = arith.constant 0 : i32
    return %arg0, %c0_i32 : i32, i32
  }
}

</mosaic_0001>

<llo_original>
// kernel: mixnet_head_forward.1
$region0: #{mixnet_head_forward.1}
  #allocation0 [shape = 'u32[]', space=smem, size = 0x4, offset = 0x4, fixed_abs, tag = 'smem constant byte address 0x4 - core index']
  #allocation1 [shape = 'u32[144,128]{1,0:T(1,128)}', space=vmem, size = 0x12000, scoped, tag = 'internal scratch']
  #allocation2 [shape = 'f32[8,512]{1,0:T(8,128)}', space=vmem, size = 0x4000, scoped, tag = 'scratch operand']
  %s0 = inlined_call_operand.vmem [shape: bf16[896,264], index: 0, kind: input, shape index: {}]
  %s1 = inlined_call_operand.vmem [shape: bf16[264,512], index: 1, kind: input, shape index: {}]
  %s2 = inlined_call_operand.vmem [shape: f32[1,512], index: 2, kind: input, shape index: {}]
  %s3 = inlined_call_operand.vmem [shape: f32[512,128], index: 3, kind: input, shape index: {}]
  %s4 = inlined_call_operand.vmem [shape: f32[1,128], index: 4, kind: input, shape index: {}]
  %s5 = inlined_call_operand.vmem [shape: f32[16,128], index: 5, kind: output, shape index: {}]
  %s6 = sld [smem:[#allocation0]]
  $region53: #{mixnet_head_forward.1} parent=0
    _
  %s8 = ssub.s32 1, %s6
  %s9 = scalar_select 0, %s8, %s6
  loop: start=0, step=1, limit=4
  $region2: #{mixnet_head_forward.1} parent=0 // loop_pre_header
    _
  $region3: #{mixnet_head_forward.1} parent=0 // loop_header
    %s11 = sphi 0, %s15
    %p12 = scmp.ge.s32.totalorder %s11, 4
    %s21 = sphi 0, %s23
    %s24 = sphi 0, %s21
    %s25 = sphi 0, %s24
    %s41 = sphi 0, %s25
    %s45 = sphi 0, %s45
    %s47 = sphi 0, %s45
    %s48 = sphi 0, %s47
    %s62 = sphi 0, %s48
    %s66 = sphi 0, %s66
    %s68 = sphi 0, %s66
    %s69 = sphi 0, %s68
    %s83 = sphi 0, %s69
    %s87 = sphi 0, %s87
    %s89 = sphi 0, %s87
    %s90 = sphi 0, %s89
    %s104 = sphi 0, %s90
    %s108 = sphi 0, %s108
    %s110 = sphi 0, %s108
    %s111 = sphi 0, %s110
    %s125 = sphi 0, %s111
    %s131 = sphi 0, %s133
    %s134 = sphi 0, %s131
    %s135 = sphi 0, %s134
    %s151 = sphi 0, %s135
  $region4: #{mixnet_head_forward.1} parent=0 // loop_header_branch
    %14 = sbr.rel (%p12) target = $region8
  $region5: #{mixnet_head_forward.1} parent=0 // loop_body
    %s16 = ssub.s32 %s11, 1
    %s17 = ssub.s32 %s11, 2
    %s18 = sadd.s32 %s11, 1
    %s19 = ssub.s32 %s11, %s18
    %p20 = scmp.eq.s32.totalorder %s19, 0
    %s22 = sadd.s32 %s21, 1
    %s23 = scalar_select %p20, %s21, %s22
    %p26 = pneg %p20
    %p27 = scmp.eq.s32.totalorder %s11, 1
    %p28 = por %p26, %p27
    %p29 = scmp.ne.s32.totalorder %s21, %s24
    %p30 = scmp.eq.s32.totalorder %s11, 0
    %p31 = por %p29, %p30
    %p32 = scmp.ne.s32.totalorder %s21, %s24
    %p33 = scmp.eq.s32.totalorder %s16, 1
    %p34 = por %p32, %p33
    %p35 = scmp.ne.s32.totalorder %s24, %s25
    %p36 = scmp.eq.s32.totalorder %s16, 0
    %p37 = por %p35, %p36
    %p38 = scmp.ne.s32.totalorder %s24, %s25
    %p39 = scmp.eq.s32.totalorder %s17, 1
    %p40 = por %p38, %p39
    %p42 = scmp.ne.s32.totalorder %s25, %s41
    %p43 = scmp.eq.s32.totalorder %s17, 0
    %p44 = por %p42, %p43
    %s46 = sadd.s32 %s45, 1
    %p49 = scmp.eq.s32.totalorder %s11, 1
    %p50 = scmp.ne.s32.totalorder %s45, %s47
    %p51 = scmp.eq.s32.totalorder %s11, 0
    %p52 = por %p50, %p51
    %p53 = scmp.ne.s32.totalorder %s45, %s47
    %p54 = scmp.eq.s32.totalorder %s16, 1
    %p55 = por %p53, %p54
    %p56 = scmp.ne.s32.totalorder %s47, %s48
    %p57 = scmp.eq.s32.totalorder %s16, 0
    %p58 = por %p56, %p57
    %p59 = scmp.ne.s32.totalorder %s47, %s48
    %p60 = scmp.eq.s32.totalorder %s17, 1
    %p61 = por %p59, %p60
    %p63 = scmp.ne.s32.totalorder %s48, %s62
    %p64 = scmp.eq.s32.totalorder %s17, 0
    %p65 = por %p63, %p64
    %s67 = sadd.s32 %s66, 1
    %p70 = scmp.eq.s32.totalorder %s11, 1
    %p71 = scmp.ne.s32.totalorder %s66, %s68
    %p72 = scmp.eq.s32.totalorder %s11, 0
    %p73 = por %p71, %p72
    %p74 = scmp.ne.s32.totalorder %s66, %s68
    %p75 = scmp.eq.s32.totalorder %s16, 1
    %p76 = por %p74, %p75
    %p77 = scmp.ne.s32.totalorder %s68, %s69
    %p78 = scmp.eq.s32.totalorder %s16, 0
    %p79 = por %p77, %p78
    %p80 = scmp.ne.s32.totalorder %s68, %s69
    %p81 = scmp.eq.s32.totalorder %s17, 1
    %p82 = por %p80, %p81
    %p84 = scmp.ne.s32.totalorder %s69, %s83
    %p85 = scmp.eq.s32.totalorder %s17, 0
    %p86 = por %p84, %p85
    %s88 = sadd.s32 %s87, 1
    %p91 = scmp.eq.s32.totalorder %s11, 1
    %p92 = scmp.ne.s32.totalorder %s87, %s89
    %p93 = scmp.eq.s32.totalorder %s11, 0
    %p94 = por %p92, %p93
    %p95 = scmp.ne.s32.totalorder %s87, %s89
    %p96 = scmp.eq.s32.totalorder %s16, 1
    %p97 = por %p95, %p96
    %p98 = scmp.ne.s32.totalorder %s89, %s90
    %p99 = scmp.eq.s32.totalorder %s16, 0
    %p100 = por %p98, %p99
    %p101 = scmp.ne.s32.totalorder %s89, %s90
    %p102 = scmp.eq.s32.totalorder %s17, 1
    %p103 = por %p101, %p102
    %p105 = scmp.ne.s32.totalorder %s90, %s104
    %p106 = scmp.eq.s32.totalorder %s17, 0
    %p107 = por %p105, %p106
    %s109 = sadd.s32 %s108, 1
    %p112 = scmp.eq.s32.totalorder %s11, 1
    %p113 = scmp.ne.s32.totalorder %s108, %s110
    %p114 = scmp.eq.s32.totalorder %s11, 0
    %p115 = por %p113, %p114
    %p116 = scmp.ne.s32.totalorder %s108, %s110
    %p117 = scmp.eq.s32.totalorder %s16, 1
    %p118 = por %p116, %p117
    %p119 = scmp.ne.s32.totalorder %s110, %s111
    %p120 = scmp.eq.s32.totalorder %s16, 0
    %p121 = por %p119, %p120
    %p122 = scmp.ne.s32.totalorder %s110, %s111
    %p123 = scmp.eq.s32.totalorder %s17, 1
    %p124 = por %p122, %p123
    %p126 = scmp.ne.s32.totalorder %s111, %s125
    %p127 = scmp.eq.s32.totalorder %s17, 0
    %p128 = por %p126, %p127
    %s129 = ssub.s32 %s11, %s18
    %p130 = scmp.eq.s32.totalorder %s129, 0
    %s132 = sadd.s32 %s131, 1
    %s133 = scalar_select %p130, %s131, %s132
    %p136 = pneg %p130
    %p137 = scmp.eq.s32.totalorder %s11, 1
    %p138 = por %p136, %p137
    %p139 = scmp.ne.s32.totalorder %s131, %s134
    %p140 = scmp.eq.s32.totalorder %s11, 0
    %p141 = por %p139, %p140
    %p142 = scmp.ne.s32.totalorder %s131, %s134
    %p143 = scmp.eq.s32.totalorder %s16, 1
    %p144 = por %p142, %p143
    %p145 = scmp.ne.s32.totalorder %s134, %s135
    %p146 = scmp.eq.s32.totalorder %s16, 0
    %p147 = por %p145, %p146
    %p148 = scmp.ne.s32.totalorder %s134, %s135
    %p149 = scmp.eq.s32.totalorder %s17, 1
    %p150 = por %p148, %p149
    %p152 = scmp.ne.s32.totalorder %s135, %s151
    %p153 = scmp.eq.s32.totalorder %s17, 0
    %p154 = por %p152, %p153
    %p155 = scmp.le.s32.totalorder 1, %s11
    %p156 = scmp.lt.s32.totalorder %s11, 3
    %p157 = pnand %p155, %p156
    %p158 = pneg %p157
    // Predicated region
    $region9: #{mixnet_head_forward.1} parent=5 // pred_check
      _
    $region10: #{mixnet_head_forward.1} parent=5 // pred_check_branch
      %160 = sbr.rel (%p157) target = $region12
    $region11: #{mixnet_head_forward.1} parent=5 // pred_region
      %s161 = ssub.s32 %s11, 1
      // Predicated region
      $region13: #{mixnet_head_forward.1} parent=11 // pred_check
        %p162 = pneg %p58
      $region14: #{mixnet_head_forward.1} parent=11 // pred_check_branch
        %164 = sbr.rel (%p162) target = $region16
      $region15: #{mixnet_head_forward.1} parent=11 // pred_region
        _
      $region16: #{mixnet_head_forward.1} parent=11 // pred_fallthru
        _
      // Predicated region
      $region17: #{mixnet_head_forward.1} parent=11 // pred_check
        %p165 = pneg %p79
      $region18: #{mixnet_head_forward.1} parent=11 // pred_check_branch
        %167 = sbr.rel (%p165) target = $region20
      $region19: #{mixnet_head_forward.1} parent=11 // pred_region
        _
      $region20: #{mixnet_head_forward.1} parent=11 // pred_fallthru
        _
      // Predicated region
      $region21: #{mixnet_head_forward.1} parent=11 // pred_check
        %p168 = pneg %p100
      $region22: #{mixnet_head_forward.1} parent=11 // pred_check_branch
        %170 = sbr.rel (%p168) target = $region24
      $region23: #{mixnet_head_forward.1} parent=11 // pred_region
        _
      $region24: #{mixnet_head_forward.1} parent=11 // pred_fallthru
        _
      // Predicated region
      $region25: #{mixnet_head_forward.1} parent=11 // pred_check
        %p171 = pneg %p121
      $region26: #{mixnet_head_forward.1} parent=11 // pred_check_branch
        %173 = sbr.rel (%p171) target = $region28
      $region27: #{mixnet_head_forward.1} parent=11 // pred_region
        _
      $region28: #{mixnet_head_forward.1} parent=11 // pred_fallthru
        _
    $region12: #{mixnet_head_forward.1} parent=5 // pred_fallthru
      _
    %p174 = scmp.lt.s32.totalorder %s11, 2
    // Predicated region
    $region29: #{mixnet_head_forward.1} parent=5 // pred_check
      %p175 = pneg %p174
    $region30: #{mixnet_head_forward.1} parent=5 // pred_check_branch
      %177 = sbr.rel (%p175) target = $region32
    $region31: #{mixnet_head_forward.1} parent=5 // pred_region
      // Predicated region
      $region33: #{mixnet_head_forward.1} parent=31 // pred_check
        %p178 = pneg %p31
      $region34: #{mixnet_head_forward.1} parent=31 // pred_check_branch
        %180 = sbr.rel (%p178) target = $region36
      $region35: #{mixnet_head_forward.1} parent=31 // pred_region
        %s181 = smul.u32 56, %s11
        %p182 = scmp.lt.s32.totalorder %s181, 111
        %s183 = scalar_select %p182, %s181, 111
        %s184 = smul.addr %s183, 3
        %s185 = smul.addr %s184, 4
        %s186 = scalar_lea.vmem %s0, %s185
        %s187 = smul.u32 56, %s11
      $region36: #{mixnet_head_forward.1} parent=31 // pred_fallthru
        _
    $region32: #{mixnet_head_forward.1} parent=5 // pred_fallthru
      _
    %p188 = scmp.le.s32.totalorder 1, %s11
    %p189 = scmp.lt.s32.totalorder %s11, 3
    %p190 = pnand %p188, %p189
    %p191 = pneg %p190
    // Predicated region
    $region37: #{mixnet_head_forward.1} parent=5 // pred_check
      _
    $region38: #{mixnet_head_forward.1} parent=5 // pred_check_branch
      %193 = sbr.rel (%p190) target = $region40
    $region39: #{mixnet_head_forward.1} parent=5 // pred_region
      %s194 = ssub.s32 %s11, 1
      %s195 = smul.u32 56, %s16
      %p196 = scmp.lt.s32.totalorder %s195, 111
      %s197 = scalar_select %p196, %s195, 111
      %s198 = smul.addr %s197, 3
      %s199 = smul.addr %s198, 4
      %s200 = scalar_lea.vmem %s0, %s199
      %p201 = pneg %p37
      %p202 = pneg %p34
      %p203 = pneg %p58
      %p204 = pneg %p55
      %p205 = pneg %p79
      %p206 = pneg %p76
      %p207 = pneg %p100
      %p208 = pneg %p97
      %p209 = pneg %p121
      %p210 = pneg %p118
      %p211 = pneg %p147
      %p212 = pneg %p144
      %p213 = scmp.lt.s32.totalorder %s16, 1
      %s214 = scalar_select %p213, %s16, 1
      %s215 = smul.addr %s214, 8
      %s216 = scalar_lea.vmem %s5, %s215
      %s217 = smul.u32 56, %s16
      %p218 = scmp.lt.s32.totalorder %s217, 111
      %s219 = scalar_select %p218, %s217, 111
      %s220 = smul.addr %s219, 3
      %s221 = smul.addr %s220, 4
      %s222 = scalar_lea.vmem %s0, %s221
      %s223 = smul.u32 56, %s16
      %p224 = scmp.lt.s32.totalorder %s16, 1
      %s225 = scalar_select %p224, %s16, 1
      %s226 = smul.addr %s225, 8
      %s227 = scalar_lea.vmem %s5, %s226
      %v229 = vld [vmem:[%s2] sm:$0xf]
      %v230 = vld [vmem:[%s222] sm:$0xff]
      %v231 = vld [vmem:[%s222 + $0x8] sm:$0xf]
      %v232 = vld [vmem:[%s222 + $0xc] sm:$0xff]
      %v233 = vld [vmem:[%s222 + $0x14] sm:$0xf]
      %v234 = vld [vmem:[%s222 + $0x18] sm:$0xff]
      %v235 = vld [vmem:[%s222 + $0x20] sm:$0xf]
      %v236 = vld [vmem:[%s222 + $0x24] sm:$0xff]
      %v237 = vld [vmem:[%s222 + $0x2c] sm:$0xf]
      %v238 = vld [vmem:[%s222 + $0x30] sm:$0xff]
      %v239 = vld [vmem:[%s222 + $0x38] sm:$0xf]
      %v240 = vld [vmem:[%s222 + $0x3c] sm:$0xff]
      %v241 = vld [vmem:[%s222 + $0x44] sm:$0xf]
      %v242 = vld [vmem:[%s222 + $0x48] sm:$0xff]
      %v243 = vld [vmem:[%s222 + $0x50] sm:$0xf]
      %v244 = vld [vmem:[%s222 + $0x54] sm:$0xff]
      %v245 = vld [vmem:[%s222 + $0x5c] sm:$0xf]
      %v246 = vld [vmem:[%s222 + $0x60] sm:$0xff]
      %v247 = vld [vmem:[%s222 + $0x68] sm:$0xf]
      %v248 = vld [vmem:[%s222 + $0x6c] sm:$0xff]
      %v249 = vld [vmem:[%s222 + $0x74] sm:$0xf]
      %v250 = vld [vmem:[%s222 + $0x78] sm:$0xff]
      %v251 = vld [vmem:[%s222 + $0x80] sm:$0xf]
      %v252 = vld [vmem:[%s222 + $0x84] sm:$0xff]
      %v253 = vld [vmem:[%s222 + $0x8c] sm:$0xf]
      %v254 = vld [vmem:[%s222 + $0x90] sm:$0xff]
      %v255 = vld [vmem:[%s222 + $0x98] sm:$0xf]
      %v256 = vld [vmem:[%s222 + $0x9c] sm:$0xff]
      %v257 = vld [vmem:[%s222 + $0xa4] sm:$0xf]
      %v258 = vld [vmem:[%s222 + $0xa8] sm:$0xff]
      %v259 = vld [vmem:[%s222 + $0xb0] sm:$0xf]
      %v260 = vld [vmem:[%s222 + $0xb4] sm:$0xff]
      %v261 = vld [vmem:[%s222 + $0xbc] sm:$0xf]
      %v262 = vld [vmem:[%s222 + $0xc0] sm:$0xff]
      %v263 = vld [vmem:[%s222 + $0xc8] sm:$0xf]
      %v264 = vld [vmem:[%s222 + $0xcc] sm:$0xff]
      %v265 = vld [vmem:[%s222 + $0xd4] sm:$0xf]
      %v266 = vld [vmem:[%s222 + $0xd8] sm:$0xff]
      %v267 = vld [vmem:[%s222 + $0xe0] sm:$0xf]
      %v268 = vld [vmem:[%s222 + $0xe4] sm:$0xff]
      %v269 = vld [vmem:[%s222 + $0xec] sm:$0xf]
      %v270 = vld [vmem:[%s222 + $0xf0] sm:$0xff]
      %v271 = vld [vmem:[%s222 + $0xf8] sm:$0xf]
      %v272 = vld [vmem:[%s222 + $0xfc] sm:$0xff]
      %v273 = vld [vmem:[%s222 + $0x104] sm:$0xf]
      %v274 = vld [vmem:[%s222 + $0x108] sm:$0xff]
      %v275 = vld [vmem:[%s222 + $0x110] sm:$0xf]
      %v276 = vld [vmem:[%s222 + $0x114] sm:$0xff]
      %v277 = vld [vmem:[%s222 + $0x11c] sm:$0xf]
      %v278 = vld [vmem:[%s222 + $0x120] sm:$0xff]
      %v279 = vld [vmem:[%s222 + $0x128] sm:$0xf]
      %v280 = vld [vmem:[%s222 + $0x12c] sm:$0xff]
      %v281 = vld [vmem:[%s222 + $0x134] sm:$0xf]
      %v282 = vld [vmem:[%s222 + $0x138] sm:$0xff]
      %v283 = vld [vmem:[%s222 + $0x140] sm:$0xf]
      %v284 = vld [vmem:[%s222 + $0x144] sm:$0xff]
      %v285 = vld [vmem:[%s222 + $0x14c] sm:$0xf]
      %v286 = vld [vmem:[%s222 + $0x150] sm:$0xff]
      %v287 = vld [vmem:[%s222 + $0x158] sm:$0xf]
      %v288 = vld [vmem:[%s222 + $0x15c] sm:$0xff]
      %v289 = vld [vmem:[%s222 + $0x164] sm:$0xf]
      %v290 = vld [vmem:[%s222 + $0x168] sm:$0xff]
      %v291 = vld [vmem:[%s222 + $0x170] sm:$0xf]
      %v292 = vld [vmem:[%s222 + $0x174] sm:$0xff]
      %v293 = vld [vmem:[%s222 + $0x17c] sm:$0xf]
      %v294 = vld [vmem:[%s222 + $0x180] sm:$0xff]
      %v295 = vld [vmem:[%s222 + $0x188] sm:$0xf]
      %v296 = vld [vmem:[%s222 + $0x18c] sm:$0xff]
      %v297 = vld [vmem:[%s222 + $0x194] sm:$0xf]
      %v298 = vld [vmem:[%s222 + $0x198] sm:$0xff]
      %v299 = vld [vmem:[%s222 + $0x1a0] sm:$0xf]
      %v300 = vld [vmem:[%s222 + $0x1a4] sm:$0xff]
      %v301 = vld [vmem:[%s222 + $0x1ac] sm:$0xf]
      %v302 = vld [vmem:[%s222 + $0x1b0] sm:$0xff]
      %v303 = vld [vmem:[%s222 + $0x1b8] sm:$0xf]
      %v304 = vld [vmem:[%s222 + $0x1bc] sm:$0xff]
      %v305 = vld [vmem:[%s222 + $0x1c4] sm:$0xf]
      %v306 = vld [vmem:[%s222 + $0x1c8] sm:$0xff]
      %v307 = vld [vmem:[%s222 + $0x1d0] sm:$0xf]
      %v308 = vld [vmem:[%s222 + $0x1d4] sm:$0xff]
      %v309 = vld [vmem:[%s222 + $0x1dc] sm:$0xf]
      %v310 = vld [vmem:[%s222 + $0x1e0] sm:$0xff]
      %v311 = vld [vmem:[%s222 + $0x1e8] sm:$0xf]
      %v312 = vld [vmem:[%s222 + $0x1ec] sm:$0xff]
      %v313 = vld [vmem:[%s222 + $0x1f4] sm:$0xf]
      %v314 = vld [vmem:[%s222 + $0x1f8] sm:$0xff]
      %v315 = vld [vmem:[%s222 + $0x200] sm:$0xf]
      %v316 = vld [vmem:[%s222 + $0x204] sm:$0xff]
      %v317 = vld [vmem:[%s222 + $0x20c] sm:$0xf]
      %v318 = vld [vmem:[%s222 + $0x210] sm:$0xff]
      %v319 = vld [vmem:[%s222 + $0x218] sm:$0xf]
      %v320 = vld [vmem:[%s222 + $0x21c] sm:$0xff]
      %v321 = vld [vmem:[%s222 + $0x224] sm:$0xf]
      %v322 = vld [vmem:[%s222 + $0x228] sm:$0xff]
      %v323 = vld [vmem:[%s222 + $0x230] sm:$0xf]
      %v324 = vld [vmem:[%s222 + $0x234] sm:$0xff]
      %v325 = vld [vmem:[%s222 + $0x23c] sm:$0xf]
      %v326 = vld [vmem:[%s222 + $0x240] sm:$0xff]
      %v327 = vld [vmem:[%s222 + $0x248] sm:$0xf]
      %v328 = vld [vmem:[%s222 + $0x24c] sm:$0xff]
      %v329 = vld [vmem:[%s222 + $0x254] sm:$0xf]
      %v330 = vld [vmem:[%s222 + $0x258] sm:$0xff]
      %v331 = vld [vmem:[%s222 + $0x260] sm:$0xf]
      %v332 = vld [vmem:[%s222 + $0x264] sm:$0xff]
      %v333 = vld [vmem:[%s222 + $0x26c] sm:$0xf]
      %v334 = vld [vmem:[%s222 + $0x270] sm:$0xff]
      %v335 = vld [vmem:[%s222 + $0x278] sm:$0xf]
      %v336 = vld [vmem:[%s222 + $0x27c] sm:$0xff]
      %v337 = vld [vmem:[%s222 + $0x284] sm:$0xf]
      %v338 = vld [vmem:[%s222 + $0x288] sm:$0xff]
      %v339 = vld [vmem:[%s222 + $0x290] sm:$0xf]
      %v340 = vld [vmem:[%s222 + $0x294] sm:$0xff]
      %v341 = vld [vmem:[%s222 + $0x29c] sm:$0xf]
      %v342 = vld [vmem:[%s1] sm:$0xff]
      %v343 = vld [vmem:[%s1 + $0x8] sm:$0xff]
      %v344 = vld [vmem:[%s1 + $0x10] sm:$0xff]
      %v345 = vld [vmem:[%s1 + $0x18] sm:$0xff]
      %v346 = vld [vmem:[%s1 + $0x20] sm:$0xff]
      %v347 = vld [vmem:[%s1 + $0x28] sm:$0xff]
      %v348 = vld [vmem:[%s1 + $0x30] sm:$0xff]
      %v349 = vld [vmem:[%s1 + $0x38] sm:$0xff]
      %v350 = vld [vmem:[%s1 + $0x40] sm:$0xff]
      %v351 = vld [vmem:[%s1 + $0x48] sm:$0xff]
      %v352 = vld [vmem:[%s1 + $0x50] sm:$0xff]
      %v353 = vld [vmem:[%s1 + $0x58] sm:$0xff]
      %v354 = vld [vmem:[%s1 + $0x60] sm:$0xff]
      %v355 = vld [vmem:[%s1 + $0x68] sm:$0xff]
      %v356 = vld [vmem:[%s1 + $0x70] sm:$0xff]
      %v357 = vld [vmem:[%s1 + $0x78] sm:$0xff]
      %v358 = vld [vmem:[%s1 + $0x80] sm:$0xff]
      %v359 = vld [vmem:[%s1 + $0x88] sm:$0xff]
      %v360 = vld [vmem:[%s1 + $0x90] sm:$0xff]
      %v361 = vld [vmem:[%s1 + $0x98] sm:$0xff]
      %v362 = vld [vmem:[%s1 + $0xa0] sm:$0xff]
      %v363 = vld [vmem:[%s1 + $0xa8] sm:$0xff]
      %v364 = vld [vmem:[%s1 + $0xb0] sm:$0xff]
      %v365 = vld [vmem:[%s1 + $0xb8] sm:$0xff]
      %v366 = vld [vmem:[%s1 + $0xc0] sm:$0xff]
      %v367 = vld [vmem:[%s1 + $0xc8] sm:$0xff]
      %v368 = vld [vmem:[%s1 + $0xd0] sm:$0xff]
      %v369 = vld [vmem:[%s1 + $0xd8] sm:$0xff]
      %v370 = vld [vmem:[%s1 + $0xe0] sm:$0xff]
      %v371 = vld [vmem:[%s1 + $0xe8] sm:$0xff]
      %v372 = vld [vmem:[%s1 + $0xf0] sm:$0xff]
      %v373 = vld [vmem:[%s1 + $0xf8] sm:$0xff]
      %v374 = vld [vmem:[%s1 + $0x100] sm:$0xff]
      %v375 = vld [vmem:[%s1 + $0x108] sm:$0xff]
      %v376 = vld [vmem:[%s1 + $0x110] sm:$0xff]
      %v377 = vld [vmem:[%s1 + $0x118] sm:$0xff]
      %v378 = vld [vmem:[%s1 + $0x120] sm:$0xff]
      %v379 = vld [vmem:[%s1 + $0x128] sm:$0xff]
      %v380 = vld [vmem:[%s1 + $0x130] sm:$0xff]
      %v381 = vld [vmem:[%s1 + $0x138] sm:$0xff]
      %v382 = vld [vmem:[%s1 + $0x140] sm:$0xff]
      %v383 = vld [vmem:[%s1 + $0x148] sm:$0xff]
      %v384 = vld [vmem:[%s1 + $0x150] sm:$0xff]
      %v385 = vld [vmem:[%s1 + $0x158] sm:$0xff]
      %v386 = vld [vmem:[%s1 + $0x160] sm:$0xff]
      %v387 = vld [vmem:[%s1 + $0x168] sm:$0xff]
      %v388 = vld [vmem:[%s1 + $0x170] sm:$0xff]
      %v389 = vld [vmem:[%s1 + $0x178] sm:$0xff]
      %v390 = vld [vmem:[%s1 + $0x180] sm:$0xff]
      %v391 = vld [vmem:[%s1 + $0x188] sm:$0xff]
      %v392 = vld [vmem:[%s1 + $0x190] sm:$0xff]
      %v393 = vld [vmem:[%s1 + $0x198] sm:$0xff]
      %v394 = vld [vmem:[%s1 + $0x1a0] sm:$0xff]
      %v395 = vld [vmem:[%s1 + $0x1a8] sm:$0xff]
      %v396 = vld [vmem:[%s1 + $0x1b0] sm:$0xff]
      %v397 = vld [vmem:[%s1 + $0x1b8] sm:$0xff]
      %v398 = vld [vmem:[%s1 + $0x1c0] sm:$0xff]
      %v399 = vld [vmem:[%s1 + $0x1c8] sm:$0xff]
      %v400 = vld [vmem:[%s1 + $0x1d0] sm:$0xff]
      %v401 = vld [vmem:[%s1 + $0x1d8] sm:$0xff]
      %v402 = vld [vmem:[%s1 + $0x1e0] sm:$0xff]
      %v403 = vld [vmem:[%s1 + $0x1e8] sm:$0xff]
      %v404 = vld [vmem:[%s1 + $0x1f0] sm:$0xff]
      %v405 = vld [vmem:[%s1 + $0x1f8] sm:$0xff]
      %v406 = vld [vmem:[%s1 + $0x200] sm:$0xff]
      %v407 = vld [vmem:[%s1 + $0x208] sm:$0xff]
      %v409 = vlaneseq
      %v410 = vshrl.u32 %v409, 7
      %v411 = vsub.s32 0, %v410
      %v412 = vrot.slane %v229, %v411
      %v413 = vlaneseq
      %v414 = vshrl.u32 %v413, 7
      %v415 = vsub.s32 1, %v414
      %v416 = vrot.slane %v229, %v415
      %v417 = vlaneseq
      %v418 = vshrl.u32 %v417, 7
      %v419 = vsub.s32 2, %v418
      %v420 = vrot.slane %v229, %v419
      %v421 = vlaneseq
      %v422 = vshrl.u32 %v421, 7
      %v423 = vsub.s32 3, %v422
      %v424 = vrot.slane %v229, %v423
      %v541 = vunpack.c.l.b16 %v230
      %v542 = vunpack.c.h.b16 %v230
      %v543 = vunpack.c.l.b16 %v231
      %v544 = vunpack.c.l.b16 %v232
      %v545 = vunpack.c.h.b16 %v232
      %v546 = vunpack.c.l.b16 %v233
      %v547 = vunpack.c.l.b16 %v234
      %v548 = vunpack.c.h.b16 %v234
      %v549 = vunpack.c.l.b16 %v235
      %v550 = vunpack.c.l.b16 %v236
      %v551 = vunpack.c.h.b16 %v236
      %v552 = vunpack.c.l.b16 %v237
      %v553 = vunpack.c.l.b16 %v238
      %v554 = vunpack.c.h.b16 %v238
      %v555 = vunpack.c.l.b16 %v239
      %v556 = vunpack.c.l.b16 %v240
      %v557 = vunpack.c.h.b16 %v240
      %v558 = vunpack.c.l.b16 %v241
      %v559 = vunpack.c.l.b16 %v242
      %v560 = vunpack.c.h.b16 %v242
      %v561 = vunpack.c.l.b16 %v243
      %v562 = vunpack.c.l.b16 %v244
      %v563 = vunpack.c.h.b16 %v244
      %v564 = vunpack.c.l.b16 %v245
      %v565 = vunpack.c.l.b16 %v246
      %v566 = vunpack.c.h.b16 %v246
      %v567 = vunpack.c.l.b16 %v247
      %v568 = vunpack.c.l.b16 %v248
      %v569 = vunpack.c.h.b16 %v248
      %v570 = vunpack.c.l.b16 %v249
      %v571 = vunpack.c.l.b16 %v250
      %v572 = vunpack.c.h.b16 %v250
      %v573 = vunpack.c.l.b16 %v251
      %v574 = vunpack.c.l.b16 %v252
      %v575 = vunpack.c.h.b16 %v252
      %v576 = vunpack.c.l.b16 %v253
      %v577 = vunpack.c.l.b16 %v254
      %v578 = vunpack.c.h.b16 %v254
      %v579 = vunpack.c.l.b16 %v255
      %v580 = vunpack.c.l.b16 %v256
      %v581 = vunpack.c.h.b16 %v256
      %v582 = vunpack.c.l.b16 %v257
      %v583 = vunpack.c.l.b16 %v258
      %v584 = vunpack.c.h.b16 %v258
      %v585 = vunpack.c.l.b16 %v259
      %v586 = vunpack.c.l.b16 %v260
      %v587 = vunpack.c.h.b16 %v260
      %v588 = vunpack.c.l.b16 %v261
      %v589 = vunpack.c.l.b16 %v262
      %v590 = vunpack.c.h.b16 %v262
      %v591 = vunpack.c.l.b16 %v263
      %v592 = vunpack.c.l.b16 %v264
      %v593 = vunpack.c.h.b16 %v264
      %v594 = vunpack.c.l.b16 %v265
      %v595 = vunpack.c.l.b16 %v266
      %v596 = vunpack.c.h.b16 %v266
      %v597 = vunpack.c.l.b16 %v267
      %v598 = vunpack.c.l.b16 %v268
      %v599 = vunpack.c.h.b16 %v268
      %v600 = vunpack.c.l.b16 %v269
      %v601 = vunpack.c.l.b16 %v270
      %v602 = vunpack.c.h.b16 %v270
      %v603 = vunpack.c.l.b16 %v271
      %v604 = vunpack.c.l.b16 %v272
      %v605 = vunpack.c.h.b16 %v272
      %v606 = vunpack.c.l.b16 %v273
      %v607 = vunpack.c.l.b16 %v274
      %v608 = vunpack.c.h.b16 %v274
      %v609 = vunpack.c.l.b16 %v275
      %v610 = vunpack.c.l.b16 %v276
      %v611 = vunpack.c.h.b16 %v276
      %v612 = vunpack.c.l.b16 %v277
      %v613 = vunpack.c.l.b16 %v278
      %v614 = vunpack.c.h.b16 %v278
      %v615 = vunpack.c.l.b16 %v279
      %v616 = vunpack.c.l.b16 %v280
      %v617 = vunpack.c.h.b16 %v280
      %v618 = vunpack.c.l.b16 %v281
      %v619 = vunpack.c.l.b16 %v282
      %v620 = vunpack.c.h.b16 %v282
      %v621 = vunpack.c.l.b16 %v283
      %v622 = vunpack.c.l.b16 %v284
      %v623 = vunpack.c.h.b16 %v284
      %v624 = vunpack.c.l.b16 %v285
      %v625 = vunpack.c.l.b16 %v286
      %v626 = vunpack.c.h.b16 %v286
      %v627 = vunpack.c.l.b16 %v287
      %v628 = vunpack.c.l.b16 %v288
      %v629 = vunpack.c.h.b16 %v288
      %v630 = vunpack.c.l.b16 %v289
      %v631 = vunpack.c.l.b16 %v290
      %v632 = vunpack.c.h.b16 %v290
      %v633 = vunpack.c.l.b16 %v291
      %v634 = vunpack.c.l.b16 %v292
      %v635 = vunpack.c.h.b16 %v292
      %v636 = vunpack.c.l.b16 %v293
      %v637 = vunpack.c.l.b16 %v294
      %v638 = vunpack.c.h.b16 %v294
      %v639 = vunpack.c.l.b16 %v295
      %v640 = vunpack.c.l.b16 %v296
      %v641 = vunpack.c.h.b16 %v296
      %v642 = vunpack.c.l.b16 %v297
      %v643 = vunpack.c.l.b16 %v298
      %v644 = vunpack.c.h.b16 %v298
      %v645 = vunpack.c.l.b16 %v299
      %v646 = vunpack.c.l.b16 %v300
      %v647 = vunpack.c.h.b16 %v300
      %v648 = vunpack.c.l.b16 %v301
      %v649 = vunpack.c.l.b16 %v302
      %v650 = vunpack.c.h.b16 %v302
      %v651 = vunpack.c.l.b16 %v303
      %v652 = vunpack.c.l.b16 %v304
      %v653 = vunpack.c.h.b16 %v304
      %v654 = vunpack.c.l.b16 %v305
      %v655 = vunpack.c.l.b16 %v306
      %v656 = vunpack.c.h.b16 %v306
      %v657 = vunpack.c.l.b16 %v307
      %v658 = vunpack.c.l.b16 %v308
      %v659 = vunpack.c.h.b16 %v308
      %v660 = vunpack.c.l.b16 %v309
      %v661 = vunpack.c.l.b16 %v310
      %v662 = vunpack.c.h.b16 %v310
      %v663 = vunpack.c.l.b16 %v311
      %v664 = vunpack.c.l.b16 %v312
      %v665 = vunpack.c.h.b16 %v312
      %v666 = vunpack.c.l.b16 %v313
      %v667 = vunpack.c.l.b16 %v314
      %v668 = vunpack.c.h.b16 %v314
      %v669 = vunpack.c.l.b16 %v315
      %v670 = vunpack.c.l.b16 %v316
      %v671 = vunpack.c.h.b16 %v316
      %v672 = vunpack.c.l.b16 %v317
      %v673 = vunpack.c.l.b16 %v318
      %v674 = vunpack.c.h.b16 %v318
      %v675 = vunpack.c.l.b16 %v319
      %v676 = vunpack.c.l.b16 %v320
      %v677 = vunpack.c.h.b16 %v320
      %v678 = vunpack.c.l.b16 %v321
      %v679 = vunpack.c.l.b16 %v322
      %v680 = vunpack.c.h.b16 %v322
      %v681 = vunpack.c.l.b16 %v323
      %v682 = vunpack.c.l.b16 %v324
      %v683 = vunpack.c.h.b16 %v324
      %v684 = vunpack.c.l.b16 %v325
      %v685 = vunpack.c.l.b16 %v326
      %v686 = vunpack.c.h.b16 %v326
      %v687 = vunpack.c.l.b16 %v327
      %v688 = vunpack.c.l.b16 %v328
      %v689 = vunpack.c.h.b16 %v328
      %v690 = vunpack.c.l.b16 %v329
      %v691 = vunpack.c.l.b16 %v330
      %v692 = vunpack.c.h.b16 %v330
      %v693 = vunpack.c.l.b16 %v331
      %v694 = vunpack.c.l.b16 %v332
      %v695 = vunpack.c.h.b16 %v332
      %v696 = vunpack.c.l.b16 %v333
      %v697 = vunpack.c.l.b16 %v334
      %v698 = vunpack.c.h.b16 %v334
      %v699 = vunpack.c.l.b16 %v335
      %v700 = vunpack.c.l.b16 %v336
      %v701 = vunpack.c.h.b16 %v336
      %v702 = vunpack.c.l.b16 %v337
      %v703 = vunpack.c.l.b16 %v338
      %v704 = vunpack.c.h.b16 %v338
      %v705 = vunpack.c.l.b16 %v339
      %v706 = vunpack.c.l.b16 %v340
      %v707 = vunpack.c.h.b16 %v340
      %v708 = vunpack.c.l.b16 %v341
      %v709 = vpack.c.b16 %v544, %v541
      %v710 = vpack.c.b16 %v545, %v542
      %v711 = vpack.c.b16 %v546, %v543
      %v712 = vpack.c.b16 %v550, %v547
      %v713 = vpack.c.b16 %v551, %v548
      %v714 = vpack.c.b16 %v552, %v549
      %v715 = vpack.c.b16 %v556, %v553
      %v716 = vpack.c.b16 %v557, %v554
      %v717 = vpack.c.b16 %v558, %v555
      %v718 = vpack.c.b16 %v562, %v559
      %v719 = vpack.c.b16 %v563, %v560
      %v720 = vpack.c.b16 %v564, %v561
      %v721 = vpack.c.b16 %v568, %v565
      %v722 = vpack.c.b16 %v569, %v566
      %v723 = vpack.c.b16 %v570, %v567
      %v724 = vpack.c.b16 %v574, %v571
      %v725 = vpack.c.b16 %v575, %v572
      %v726 = vpack.c.b16 %v576, %v573
      %v727 = vpack.c.b16 %v580, %v577
      %v728 = vpack.c.b16 %v581, %v578
      %v729 = vpack.c.b16 %v582, %v579
      %v730 = vpack.c.b16 %v586, %v583
      %v731 = vpack.c.b16 %v587, %v584
      %v732 = vpack.c.b16 %v588, %v585
      %v733 = vpack.c.b16 %v592, %v589
      %v734 = vpack.c.b16 %v593, %v590
      %v735 = vpack.c.b16 %v594, %v591
      %v736 = vpack.c.b16 %v598, %v595
      %v737 = vpack.c.b16 %v599, %v596
      %v738 = vpack.c.b16 %v600, %v597
      %v739 = vpack.c.b16 %v604, %v601
      %v740 = vpack.c.b16 %v605, %v602
      %v741 = vpack.c.b16 %v606, %v603
      %v742 = vpack.c.b16 %v610, %v607
      %v743 = vpack.c.b16 %v611, %v608
      %v744 = vpack.c.b16 %v612, %v609
      %v745 = vpack.c.b16 %v616, %v613
      %v746 = vpack.c.b16 %v617, %v614
      %v747 = vpack.c.b16 %v618, %v615
      %v748 = vpack.c.b16 %v622, %v619
      %v749 = vpack.c.b16 %v623, %v620
      %v750 = vpack.c.b16 %v624, %v621
      %v751 = vpack.c.b16 %v628, %v625
      %v752 = vpack.c.b16 %v629, %v626
      %v753 = vpack.c.b16 %v630, %v627
      %v754 = vpack.c.b16 %v634, %v631
      %v755 = vpack.c.b16 %v635, %v632
      %v756 = vpack.c.b16 %v636, %v633
      %v757 = vpack.c.b16 %v640, %v637
      %v758 = vpack.c.b16 %v641, %v638
      %v759 = vpack.c.b16 %v642, %v639
      %v760 = vpack.c.b16 %v646, %v643
      %v761 = vpack.c.b16 %v647, %v644
      %v762 = vpack.c.b16 %v648, %v645
      %v763 = vpack.c.b16 %v652, %v649
      %v764 = vpack.c.b16 %v653, %v650
      %v765 = vpack.c.b16 %v654, %v651
      %v766 = vpack.c.b16 %v658, %v655
      %v767 = vpack.c.b16 %v659, %v656
      %v768 = vpack.c.b16 %v660, %v657
      %v769 = vpack.c.b16 %v664, %v661
      %v770 = vpack.c.b16 %v665, %v662
      %v771 = vpack.c.b16 %v666, %v663
      %v772 = vpack.c.b16 %v670, %v667
      %v773 = vpack.c.b16 %v671, %v668
      %v774 = vpack.c.b16 %v672, %v669
      %v775 = vpack.c.b16 %v676, %v673
      %v776 = vpack.c.b16 %v677, %v674
      %v777 = vpack.c.b16 %v678, %v675
      %v778 = vpack.c.b16 %v682, %v679
      %v779 = vpack.c.b16 %v683, %v680
      %v780 = vpack.c.b16 %v684, %v681
      %v781 = vpack.c.b16 %v688, %v685
      %v782 = vpack.c.b16 %v689, %v686
      %v783 = vpack.c.b16 %v690, %v687
      %v784 = vpack.c.b16 %v694, %v691
      %v785 = vpack.c.b16 %v695, %v692
      %v786 = vpack.c.b16 %v696, %v693
      %v787 = vpack.c.b16 %v700, %v697
      %v788 = vpack.c.b16 %v701, %v698
      %v789 = vpack.c.b16 %v702, %v699
      %v790 = vpack.c.b16 %v706, %v703
      %v791 = vpack.c.b16 %v707, %v704
      %v792 = vpack.c.b16 %v708, %v705
      %v915 = vunpack.c.l.b16 %v342
      %v916 = vunpack.c.h.b16 %v342
      %v917 = vunpack.c.l.b16 %v343
      %v918 = vunpack.c.h.b16 %v343
      %v919 = vunpack.c.l.b16 %v344
      %v920 = vunpack.c.h.b16 %v344
      %v921 = vunpack.c.l.b16 %v345
      %v922 = vunpack.c.h.b16 %v345
      %v923 = vunpack.c.l.b16 %v346
      %v924 = vunpack.c.h.b16 %v346
      %v925 = vunpack.c.l.b16 %v347
      %v926 = vunpack.c.h.b16 %v347
      %v927 = vunpack.c.l.b16 %v348
      %v928 = vunpack.c.h.b16 %v348
      %v929 = vunpack.c.l.b16 %v349
      %v930 = vunpack.c.h.b16 %v349
      %v931 = vunpack.c.l.b16 %v350
      %v932 = vunpack.c.h.b16 %v350
      %v933 = vunpack.c.l.b16 %v351
      %v934 = vunpack.c.h.b16 %v351
      %v935 = vunpack.c.l.b16 %v352
      %v936 = vunpack.c.h.b16 %v352
      %v937 = vunpack.c.l.b16 %v353
      %v938 = vunpack.c.h.b16 %v353
      %v939 = vunpack.c.l.b16 %v354
      %v940 = vunpack.c.h.b16 %v354
      %v941 = vunpack.c.l.b16 %v355
      %v942 = vunpack.c.h.b16 %v355
      %v943 = vunpack.c.l.b16 %v356
      %v944 = vunpack.c.h.b16 %v356
      %v945 = vunpack.c.l.b16 %v357
      %v946 = vunpack.c.h.b16 %v357
      %v947 = vunpack.c.l.b16 %v358
      %v948 = vunpack.c.h.b16 %v358
      %v949 = vunpack.c.l.b16 %v359
      %v950 = vunpack.c.h.b16 %v359
      %v951 = vunpack.c.l.b16 %v360
      %v952 = vunpack.c.h.b16 %v360
      %v953 = vunpack.c.l.b16 %v361
      %v954 = vunpack.c.h.b16 %v361
      %v955 = vunpack.c.l.b16 %v362
      %v956 = vunpack.c.h.b16 %v362
      %v957 = vunpack.c.l.b16 %v363
      %v958 = vunpack.c.h.b16 %v363
      %v959 = vunpack.c.l.b16 %v364
      %v960 = vunpack.c.h.b16 %v364
      %v961 = vunpack.c.l.b16 %v365
      %v962 = vunpack.c.h.b16 %v365
      %v963 = vunpack.c.l.b16 %v366
      %v964 = vunpack.c.h.b16 %v366
      %v965 = vunpack.c.l.b16 %v367
      %v966 = vunpack.c.h.b16 %v367
      %v967 = vunpack.c.l.b16 %v368
      %v968 = vunpack.c.h.b16 %v368
      %v969 = vunpack.c.l.b16 %v369
      %v970 = vunpack.c.h.b16 %v369
      %v971 = vunpack.c.l.b16 %v370
      %v972 = vunpack.c.h.b16 %v370
      %v973 = vunpack.c.l.b16 %v371
      %v974 = vunpack.c.h.b16 %v371
      %v975 = vunpack.c.l.b16 %v372
      %v976 = vunpack.c.h.b16 %v372
      %v977 = vunpack.c.l.b16 %v373
      %v978 = vunpack.c.h.b16 %v373
      %v979 = vunpack.c.l.b16 %v374
      %v980 = vunpack.c.h.b16 %v374
      %v981 = vunpack.c.l.b16 %v375
      %v982 = vunpack.c.h.b16 %v375
      %v983 = vunpack.c.l.b16 %v376
      %v984 = vunpack.c.h.b16 %v376
      %v985 = vunpack.c.l.b16 %v377
      %v986 = vunpack.c.h.b16 %v377
      %v987 = vunpack.c.l.b16 %v378
      %v988 = vunpack.c.h.b16 %v378
      %v989 = vunpack.c.l.b16 %v379
      %v990 = vunpack.c.h.b16 %v379
      %v991 = vunpack.c.l.b16 %v380
      %v992 = vunpack.c.h.b16 %v380
      %v993 = vunpack.c.l.b16 %v381
      %v994 = vunpack.c.h.b16 %v381
      %v995 = vunpack.c.l.b16 %v382
      %v996 = vunpack.c.h.b16 %v382
      %v997 = vunpack.c.l.b16 %v383
      %v998 = vunpack.c.h.b16 %v383
      %v999 = vunpack.c.l.b16 %v384
      %v1000 = vunpack.c.h.b16 %v384
      %v1001 = vunpack.c.l.b16 %v385
      %v1002 = vunpack.c.h.b16 %v385
      %v1003 = vunpack.c.l.b16 %v386
      %v1004 = vunpack.c.h.b16 %v386
      %v1005 = vunpack.c.l.b16 %v387
      %v1006 = vunpack.c.h.b16 %v387
      %v1007 = vunpack.c.l.b16 %v388
      %v1008 = vunpack.c.h.b16 %v388
      %v1009 = vunpack.c.l.b16 %v389
      %v1010 = vunpack.c.h.b16 %v389
      %v1011 = vunpack.c.l.b16 %v390
      %v1012 = vunpack.c.h.b16 %v390
      %v1013 = vunpack.c.l.b16 %v391
      %v1014 = vunpack.c.h.b16 %v391
      %v1015 = vunpack.c.l.b16 %v392
      %v1016 = vunpack.c.h.b16 %v392
      %v1017 = vunpack.c.l.b16 %v393
      %v1018 = vunpack.c.h.b16 %v393
      %v1019 = vunpack.c.l.b16 %v394
      %v1020 = vunpack.c.h.b16 %v394
      %v1021 = vunpack.c.l.b16 %v395
      %v1022 = vunpack.c.h.b16 %v395
      %v1023 = vunpack.c.l.b16 %v396
      %v1024 = vunpack.c.h.b16 %v396
      %v1025 = vunpack.c.l.b16 %v397
      %v1026 = vunpack.c.h.b16 %v397
      %v1027 = vunpack.c.l.b16 %v398
      %v1028 = vunpack.c.h.b16 %v398
      %v1029 = vunpack.c.l.b16 %v399
      %v1030 = vunpack.c.h.b16 %v399
      %v1031 = vunpack.c.l.b16 %v400
      %v1032 = vunpack.c.h.b16 %v400
      %v1033 = vunpack.c.l.b16 %v401
      %v1034 = vunpack.c.h.b16 %v401
      %v1035 = vunpack.c.l.b16 %v402
      %v1036 = vunpack.c.h.b16 %v402
      %v1037 = vunpack.c.l.b16 %v403
      %v1038 = vunpack.c.h.b16 %v403
      %v1039 = vunpack.c.l.b16 %v404
      %v1040 = vunpack.c.h.b16 %v404
      %v1041 = vunpack.c.l.b16 %v405
      %v1042 = vunpack.c.h.b16 %v405
      %v1043 = vunpack.c.l.b16 %v406
      %v1044 = vunpack.c.h.b16 %v406
      %v1045 = vunpack.c.l.b16 %v407
      %v1046 = vunpack.c.h.b16 %v407
      %v1047 = vpack.c.b16 %v919, %v915
      %v1048 = vpack.c.b16 %v920, %v916
      %v1049 = vpack.c.b16 %v921, %v917
      %v1050 = vpack.c.b16 %v922, %v918
      %v1051 = vpack.c.b16 %v927, %v923
      %v1052 = vpack.c.b16 %v928, %v924
      %v1053 = vpack.c.b16 %v929, %v925
      %v1054 = vpack.c.b16 %v930, %v926
      %v1055 = vpack.c.b16 %v935, %v931
      %v1056 = vpack.c.b16 %v936, %v932
      %v1057 = vpack.c.b16 %v937, %v933
      %v1058 = vpack.c.b16 %v938, %v934
      %v1059 = vpack.c.b16 %v943, %v939
      %v1060 = vpack.c.b16 %v944, %v940
      %v1061 = vpack.c.b16 %v945, %v941
      %v1062 = vpack.c.b16 %v946, %v942
      %v1063 = vpack.c.b16 %v951, %v947
      %v1064 = vpack.c.b16 %v952, %v948
      %v1065 = vpack.c.b16 %v953, %v949
      %v1066 = vpack.c.b16 %v954, %v950
      %v1067 = vpack.c.b16 %v959, %v955
      %v1068 = vpack.c.b16 %v960, %v956
      %v1069 = vpack.c.b16 %v961, %v957
      %v1070 = vpack.c.b16 %v962, %v958
      %v1071 = vpack.c.b16 %v967, %v963
      %v1072 = vpack.c.b16 %v968, %v964
      %v1073 = vpack.c.b16 %v969, %v965
      %v1074 = vpack.c.b16 %v970, %v966
      %v1075 = vpack.c.b16 %v975, %v971
      %v1076 = vpack.c.b16 %v976, %v972
      %v1077 = vpack.c.b16 %v977, %v973
      %v1078 = vpack.c.b16 %v978, %v974
      %v1079 = vpack.c.b16 %v983, %v979
      %v1080 = vpack.c.b16 %v984, %v980
      %v1081 = vpack.c.b16 %v985, %v981
      %v1082 = vpack.c.b16 %v986, %v982
      %v1083 = vpack.c.b16 %v991, %v987
      %v1084 = vpack.c.b16 %v992, %v988
      %v1085 = vpack.c.b16 %v993, %v989
      %v1086 = vpack.c.b16 %v994, %v990
      %v1087 = vpack.c.b16 %v999, %v995
      %v1088 = vpack.c.b16 %v1000, %v996
      %v1089 = vpack.c.b16 %v1001, %v997
      %v1090 = vpack.c.b16 %v1002, %v998
      %v1091 = vpack.c.b16 %v1007, %v1003
      %v1092 = vpack.c.b16 %v1008, %v1004
      %v1093 = vpack.c.b16 %v1009, %v1005
      %v1094 = vpack.c.b16 %v1010, %v1006
      %v1095 = vpack.c.b16 %v1015, %v1011
      %v1096 = vpack.c.b16 %v1016, %v1012
      %v1097 = vpack.c.b16 %v1017, %v1013
      %v1098 = vpack.c.b16 %v1018, %v1014
      %v1099 = vpack.c.b16 %v1023, %v1019
      %v1100 = vpack.c.b16 %v1024, %v1020
      %v1101 = vpack.c.b16 %v1025, %v1021
      %v1102 = vpack.c.b16 %v1026, %v1022
      %v1103 = vpack.c.b16 %v1031, %v1027
      %v1104 = vpack.c.b16 %v1032, %v1028
      %v1105 = vpack.c.b16 %v1033, %v1029
      %v1106 = vpack.c.b16 %v1034, %v1030
      %v1107 = vpack.c.b16 %v1039, %v1035
      %v1108 = vpack.c.b16 %v1040, %v1036
      %v1109 = vpack.c.b16 %v1041, %v1037
      %v1110 = vpack.c.b16 %v1042, %v1038
      %v1111 = vpack.c.b16 %v1043, %v1043
      %v1112 = vpack.c.b16 %v1044, %v1044
      %v1113 = vpack.c.b16 %v1045, %v1045
      %v1114 = vpack.c.b16 %v1046, %v1046
      %vm1179 = vcmask 64512
      %v1181 = vsel %vm1179, %v711, 0
      %v1184 = vsel %vm1179, %v714, 0
      %v1187 = vsel %vm1179, %v717, 0
      %v1190 = vsel %vm1179, %v720, 0
      %v1193 = vsel %vm1179, %v723, 0
      %v1196 = vsel %vm1179, %v726, 0
      %v1199 = vsel %vm1179, %v729, 0
      %v1202 = vsel %vm1179, %v732, 0
      %v1205 = vsel %vm1179, %v735, 0
      %v1208 = vsel %vm1179, %v738, 0
      %v1211 = vsel %vm1179, %v741, 0
      %v1214 = vsel %vm1179, %v744, 0
      %v1217 = vsel %vm1179, %v747, 0
      %v1220 = vsel %vm1179, %v750, 0
      %v1223 = vsel %vm1179, %v753, 0
      %v1226 = vsel %vm1179, %v756, 0
      %v1229 = vsel %vm1179, %v759, 0
      %v1232 = vsel %vm1179, %v762, 0
      %v1235 = vsel %vm1179, %v765, 0
      %v1238 = vsel %vm1179, %v768, 0
      %v1241 = vsel %vm1179, %v771, 0
      %v1244 = vsel %vm1179, %v774, 0
      %v1247 = vsel %vm1179, %v777, 0
      %v1250 = vsel %vm1179, %v780, 0
      %v1253 = vsel %vm1179, %v783, 0
      %v1256 = vsel %vm1179, %v786, 0
      %v1259 = vsel %vm1179, %v789, 0
      %v1262 = vsel %vm1179, %v792, 0
      %vm1264 = vcmask 1043456
      %v1266 = vsel %vm1264, %v1111, 0
      %v1269 = vsel %vm1264, %v1112, 0
      %v1272 = vsel %vm1264, %v1113, 0
      %v1275 = vsel %vm1264, %v1114, 0
      %1277 = vmatprep.subr.bf16.mxu0 %v1076
      %1278 = vmatpush1.bf16.msra.mxu0 %v1075
      %1279 = vmatprep.subr.bf16.mxu0 %v1072
      %1280 = vmatpush1.bf16.msra.mxu0 %v1071
      %1281 = vmatprep.subr.bf16.mxu0 %v1068
      %1282 = vmatpush1.bf16.msra.mxu0 %v1067
      %1283 = vmatprep.subr.bf16.mxu0 %v1064
      %1284 = vmatpush1.bf16.msra.mxu0 %v1063
      %1285 = vmatprep.subr.bf16.mxu0 %v1060
      %1286 = vmatpush1.bf16.msra.mxu0 %v1059
      %1287 = vmatprep.subr.bf16.mxu0 %v1056
      %1288 = vmatpush1.bf16.msra.mxu0 %v1055
      %1289 = vmatprep.subr.bf16.mxu0 %v1052
      %1290 = vmatpush1.bf16.msra.mxu0 %v1051
      %1291 = vmatprep.subr.bf16.mxu0 %v1048
      %1292 = vmatpush1.bf16.msra.mxu0 %v1047
      %1293 = vmatprep.subr.bf16.mxu0 %v1108
      %1294 = vmatpush2.bf16.msra.mxu0 %v1107
      %1295 = vmatprep.subr.bf16.mxu0 %v1104
      %1296 = vmatpush2.bf16.msra.mxu0 %v1103
      %1297 = vmatprep.subr.bf16.mxu0 %v1100
      %1298 = vmatpush2.bf16.msra.mxu0 %v1099
      %1299 = vmatprep.subr.bf16.mxu0 %v1096
      %1300 = vmatpush2.bf16.msra.mxu0 %v1095
      %1301 = vmatprep.subr.bf16.mxu0 %v1092
      %1302 = vmatpush2.bf16.msra.mxu0 %v1091
      %1303 = vmatprep.subr.bf16.mxu0 %v1088
      %1304 = vmatpush2.bf16.msra.mxu0 %v1087
      %1305 = vmatprep.subr.bf16.mxu0 %v1084
      %1306 = vmatpush2.bf16.msra.mxu0 %v1083
      %1307 = vmatprep.subr.bf16.mxu0 %v1080
      %1308 = vmatpush2.bf16.msra.mxu0 %v1079
      %1309 = vmatprep.mubr.bf16.mxu0 %v710
      %1310 = vmatmul.mubr.bf16.gmra.mxu0 %v709
      %v1311 = vpop.f32.mrf.mxu0
      %v1312 = vadd.f32 %v412, %v1311
      %v1313 = vpop.f32.mrf.mxu0
      %v1314 = vadd.f32 %v416, %v1313
      %v1315 = vpop.f32.mrf.mxu0
      %v1316 = vadd.f32 %v412, %v1315
      %v1317 = vpop.f32.mrf.mxu0
      %v1318 = vadd.f32 %v416, %v1317
      %1319 = vmatprep.mubr.bf16.mxu0 %v713
      %1320 = vmatmul.mubr.bf16.gmra.mxu0 %v712
      %v1321 = vpop.f32.mrf.mxu0
      %v1322 = vadd.f32 %v412, %v1321
      %v1323 = vpop.f32.mrf.mxu0
      %v1324 = vadd.f32 %v416, %v1323
      %v1325 = vpop.f32.mrf.mxu0
      %v1326 = vadd.f32 %v412, %v1325
      %v1327 = vpop.f32.mrf.mxu0
      %v1328 = vadd.f32 %v416, %v1327
      %1329 = vmatprep.mubr.bf16.mxu0 %v716
      %1330 = vmatmul.mubr.bf16.gmra.mxu0 %v715
      %v1331 = vpop.f32.mrf.mxu0
      %v1332 = vadd.f32 %v412, %v1331
      %v1333 = vpop.f32.mrf.mxu0
      %v1334 = vadd.f32 %v416, %v1333
      %v1335 = vpop.f32.mrf.mxu0
      %v1336 = vadd.f32 %v412, %v1335
      %v1337 = vpop.f32.mrf.mxu0
      %v1338 = vadd.f32 %v416, %v1337
      %1339 = vmatprep.mubr.bf16.mxu0 %v719
      %1340 = vmatmul.mubr.bf16.gmra.mxu0 %v718
      %v1341 = vpop.f32.mrf.mxu0
      %v1342 = vadd.f32 %v412, %v1341
      %v1343 = vpop.f32.mrf.mxu0
      %v1344 = vadd.f32 %v416, %v1343
      %v1345 = vpop.f32.mrf.mxu0
      %v1346 = vadd.f32 %v412, %v1345
      %v1347 = vpop.f32.mrf.mxu0
      %v1348 = vadd.f32 %v416, %v1347
      %1349 = vmatprep.mubr.bf16.mxu0 %v722
      %1350 = vmatmul.mubr.bf16.gmra.mxu0 %v721
      %v1351 = vpop.f32.mrf.mxu0
      %v1352 = vadd.f32 %v412, %v1351
      %v1353 = vpop.f32.mrf.mxu0
      %v1354 = vadd.f32 %v416, %v1353
      %v1355 = vpop.f32.mrf.mxu0
      %v1356 = vadd.f32 %v412, %v1355
      %v1357 = vpop.f32.mrf.mxu0
      %v1358 = vadd.f32 %v416, %v1357
      %1359 = vmatprep.mubr.bf16.mxu0 %v725
      %1360 = vmatmul.mubr.bf16.gmra.mxu0 %v724
      %v1361 = vpop.f32.mrf.mxu0
      %v1362 = vadd.f32 %v412, %v1361
      %v1363 = vpop.f32.mrf.mxu0
      %v1364 = vadd.f32 %v416, %v1363
      %v1365 = vpop.f32.mrf.mxu0
      %v1366 = vadd.f32 %v412, %v1365
      %v1367 = vpop.f32.mrf.mxu0
      %v1368 = vadd.f32 %v416, %v1367
      %1369 = vmatprep.mubr.bf16.mxu0 %v728
      %1370 = vmatmul.mubr.bf16.gmra.mxu0 %v727
      %v1371 = vpop.f32.mrf.mxu0
      %v1372 = vadd.f32 %v412, %v1371
      %v1373 = vpop.f32.mrf.mxu0
      %v1374 = vadd.f32 %v416, %v1373
      %v1375 = vpop.f32.mrf.mxu0
      %v1376 = vadd.f32 %v412, %v1375
      %v1377 = vpop.f32.mrf.mxu0
      %v1378 = vadd.f32 %v416, %v1377
      %1379 = vmatprep.mubr.bf16.mxu0 %v731
      %1380 = vmatmul.mubr.bf16.gmra.mxu0 %v730
      %v1381 = vpop.f32.mrf.mxu0
      %v1382 = vadd.f32 %v412, %v1381
      %v1383 = vpop.f32.mrf.mxu0
      %v1384 = vadd.f32 %v416, %v1383
      %v1385 = vpop.f32.mrf.mxu0
      %v1386 = vadd.f32 %v412, %v1385
      %v1387 = vpop.f32.mrf.mxu0
      %v1388 = vadd.f32 %v416, %v1387
      %1389 = vmatprep.mubr.bf16.mxu0 %v734
      %1390 = vmatmul.mubr.bf16.gmra.mxu0 %v733
      %v1391 = vpop.f32.mrf.mxu0
      %v1392 = vadd.f32 %v412, %v1391
      %v1393 = vpop.f32.mrf.mxu0
      %v1394 = vadd.f32 %v416, %v1393
      %v1395 = vpop.f32.mrf.mxu0
      %v1396 = vadd.f32 %v412, %v1395
      %v1397 = vpop.f32.mrf.mxu0
      %v1398 = vadd.f32 %v416, %v1397
      %1399 = vmatprep.mubr.bf16.mxu0 %v737
      %1400 = vmatmul.mubr.bf16.gmra.mxu0 %v736
      %v1401 = vpop.f32.mrf.mxu0
      %v1402 = vadd.f32 %v412, %v1401
      %v1403 = vpop.f32.mrf.mxu0
      %v1404 = vadd.f32 %v416, %v1403
      %v1405 = vpop.f32.mrf.mxu0
      %v1406 = vadd.f32 %v412, %v1405
      %v1407 = vpop.f32.mrf.mxu0
      %v1408 = vadd.f32 %v416, %v1407
      %1409 = vmatprep.mubr.bf16.mxu0 %v740
      %1410 = vmatmul.mubr.bf16.gmra.mxu0 %v739
      %v1411 = vpop.f32.mrf.mxu0
      %v1412 = vadd.f32 %v412, %v1411
      %v1413 = vpop.f32.mrf.mxu0
      %v1414 = vadd.f32 %v416, %v1413
      %v1415 = vpop.f32.mrf.mxu0
      %v1416 = vadd.f32 %v412, %v1415
      %v1417 = vpop.f32.mrf.mxu0
      %v1418 = vadd.f32 %v416, %v1417
      %1419 = vmatprep.mubr.bf16.mxu0 %v743
      %1420 = vmatmul.mubr.bf16.gmra.mxu0 %v742
      %v1421 = vpop.f32.mrf.mxu0
      %v1422 = vadd.f32 %v412, %v1421
      %v1423 = vpop.f32.mrf.mxu0
      %v1424 = vadd.f32 %v416, %v1423
      %v1425 = vpop.f32.mrf.mxu0
      %v1426 = vadd.f32 %v412, %v1425
      %v1427 = vpop.f32.mrf.mxu0
      %v1428 = vadd.f32 %v416, %v1427
      %1429 = vmatprep.mubr.bf16.mxu0 %v746
      %1430 = vmatmul.mubr.bf16.gmra.mxu0 %v745
      %v1431 = vpop.f32.mrf.mxu0
      %v1432 = vadd.f32 %v412, %v1431
      %v1433 = vpop.f32.mrf.mxu0
      %v1434 = vadd.f32 %v416, %v1433
      %v1435 = vpop.f32.mrf.mxu0
      %v1436 = vadd.f32 %v412, %v1435
      %v1437 = vpop.f32.mrf.mxu0
      %v1438 = vadd.f32 %v416, %v1437
      %1439 = vmatprep.mubr.bf16.mxu0 %v749
      %1440 = vmatmul.mubr.bf16.gmra.mxu0 %v748
      %v1441 = vpop.f32.mrf.mxu0
      %v1442 = vadd.f32 %v412, %v1441
      %v1443 = vpop.f32.mrf.mxu0
      %v1444 = vadd.f32 %v416, %v1443
      %v1445 = vpop.f32.mrf.mxu0
      %v1446 = vadd.f32 %v412, %v1445
      %v1447 = vpop.f32.mrf.mxu0
      %v1448 = vadd.f32 %v416, %v1447
      %1449 = vmatprep.mubr.bf16.mxu0 %v752
      %1450 = vmatmul.mubr.bf16.gmra.mxu0 %v751
      %v1451 = vpop.f32.mrf.mxu0
      %v1452 = vadd.f32 %v412, %v1451
      %v1453 = vpop.f32.mrf.mxu0
      %v1454 = vadd.f32 %v416, %v1453
      %v1455 = vpop.f32.mrf.mxu0
      %v1456 = vadd.f32 %v412, %v1455
      %v1457 = vpop.f32.mrf.mxu0
      %v1458 = vadd.f32 %v416, %v1457
      %1459 = vmatprep.mubr.bf16.mxu0 %v755
      %1460 = vmatmul.mubr.bf16.gmra.mxu0 %v754
      %v1461 = vpop.f32.mrf.mxu0
      %v1462 = vadd.f32 %v412, %v1461
      %v1463 = vpop.f32.mrf.mxu0
      %v1464 = vadd.f32 %v416, %v1463
      %v1465 = vpop.f32.mrf.mxu0
      %v1466 = vadd.f32 %v412, %v1465
      %v1467 = vpop.f32.mrf.mxu0
      %v1468 = vadd.f32 %v416, %v1467
      %1469 = vmatprep.mubr.bf16.mxu0 %v758
      %1470 = vmatmul.mubr.bf16.gmra.mxu0 %v757
      %v1471 = vpop.f32.mrf.mxu0
      %v1472 = vadd.f32 %v412, %v1471
      %v1473 = vpop.f32.mrf.mxu0
      %v1474 = vadd.f32 %v416, %v1473
      %v1475 = vpop.f32.mrf.mxu0
      %v1476 = vadd.f32 %v412, %v1475
      %v1477 = vpop.f32.mrf.mxu0
      %v1478 = vadd.f32 %v416, %v1477
      %1479 = vmatprep.mubr.bf16.mxu0 %v761
      %1480 = vmatmul.mubr.bf16.gmra.mxu0 %v760
      %v1481 = vpop.f32.mrf.mxu0
      %v1482 = vadd.f32 %v412, %v1481
      %v1483 = vpop.f32.mrf.mxu0
      %v1484 = vadd.f32 %v416, %v1483
      %v1485 = vpop.f32.mrf.mxu0
      %v1486 = vadd.f32 %v412, %v1485
      %v1487 = vpop.f32.mrf.mxu0
      %v1488 = vadd.f32 %v416, %v1487
      %1489 = vmatprep.mubr.bf16.mxu0 %v764
      %1490 = vmatmul.mubr.bf16.gmra.mxu0 %v763
      %v1491 = vpop.f32.mrf.mxu0
      %v1492 = vadd.f32 %v412, %v1491
      %v1493 = vpop.f32.mrf.mxu0
      %v1494 = vadd.f32 %v416, %v1493
      %v1495 = vpop.f32.mrf.mxu0
      %v1496 = vadd.f32 %v412, %v1495
      %v1497 = vpop.f32.mrf.mxu0
      %v1498 = vadd.f32 %v416, %v1497
      %1499 = vmatprep.mubr.bf16.mxu0 %v767
      %1500 = vmatmul.mubr.bf16.gmra.mxu0 %v766
      %v1501 = vpop.f32.mrf.mxu0
      %v1502 = vadd.f32 %v412, %v1501
      %v1503 = vpop.f32.mrf.mxu0
      %v1504 = vadd.f32 %v416, %v1503
      %v1505 = vpop.f32.mrf.mxu0
      %v1506 = vadd.f32 %v412, %v1505
      %v1507 = vpop.f32.mrf.mxu0
      %v1508 = vadd.f32 %v416, %v1507
      %1509 = vmatprep.mubr.bf16.mxu0 %v770
      %1510 = vmatmul.mubr.bf16.gmra.mxu0 %v769
      %v1511 = vpop.f32.mrf.mxu0
      %v1512 = vadd.f32 %v412, %v1511
      %v1513 = vpop.f32.mrf.mxu0
      %v1514 = vadd.f32 %v416, %v1513
      %v1515 = vpop.f32.mrf.mxu0
      %v1516 = vadd.f32 %v412, %v1515
      %v1517 = vpop.f32.mrf.mxu0
      %v1518 = vadd.f32 %v416, %v1517
      %1519 = vmatprep.mubr.bf16.mxu0 %v773
      %1520 = vmatmul.mubr.bf16.gmra.mxu0 %v772
      %v1521 = vpop.f32.mrf.mxu0
      %v1522 = vadd.f32 %v412, %v1521
      %v1523 = vpop.f32.mrf.mxu0
      %v1524 = vadd.f32 %v416, %v1523
      %v1525 = vpop.f32.mrf.mxu0
      %v1526 = vadd.f32 %v412, %v1525
      %v1527 = vpop.f32.mrf.mxu0
      %v1528 = vadd.f32 %v416, %v1527
      %1529 = vmatprep.mubr.bf16.mxu0 %v776
      %1530 = vmatmul.mubr.bf16.gmra.mxu0 %v775
      %v1531 = vpop.f32.mrf.mxu0
      %v1532 = vadd.f32 %v412, %v1531
      %v1533 = vpop.f32.mrf.mxu0
      %v1534 = vadd.f32 %v416, %v1533
      %v1535 = vpop.f32.mrf.mxu0
      %v1536 = vadd.f32 %v412, %v1535
      %v1537 = vpop.f32.mrf.mxu0
      %v1538 = vadd.f32 %v416, %v1537
      %1539 = vmatprep.mubr.bf16.mxu0 %v779
      %1540 = vmatmul.mubr.bf16.gmra.mxu0 %v778
      %v1541 = vpop.f32.mrf.mxu0
      %v1542 = vadd.f32 %v412, %v1541
      %v1543 = vpop.f32.mrf.mxu0
      %v1544 = vadd.f32 %v416, %v1543
      %v1545 = vpop.f32.mrf.mxu0
      %v1546 = vadd.f32 %v412, %v1545
      %v1547 = vpop.f32.mrf.mxu0
      %v1548 = vadd.f32 %v416, %v1547
      %1549 = vmatprep.mubr.bf16.mxu0 %v782
      %1550 = vmatmul.mubr.bf16.gmra.mxu0 %v781
      %v1551 = vpop.f32.mrf.mxu0
      %v1552 = vadd.f32 %v412, %v1551
      %v1553 = vpop.f32.mrf.mxu0
      %v1554 = vadd.f32 %v416, %v1553
      %v1555 = vpop.f32.mrf.mxu0
      %v1556 = vadd.f32 %v412, %v1555
      %v1557 = vpop.f32.mrf.mxu0
      %v1558 = vadd.f32 %v416, %v1557
      %1559 = vmatprep.mubr.bf16.mxu0 %v785
      %1560 = vmatmul.mubr.bf16.gmra.mxu0 %v784
      %v1561 = vpop.f32.mrf.mxu0
      %v1562 = vadd.f32 %v412, %v1561
      %v1563 = vpop.f32.mrf.mxu0
      %v1564 = vadd.f32 %v416, %v1563
      %v1565 = vpop.f32.mrf.mxu0
      %v1566 = vadd.f32 %v412, %v1565
      %v1567 = vpop.f32.mrf.mxu0
      %v1568 = vadd.f32 %v416, %v1567
      %1569 = vmatprep.mubr.bf16.mxu0 %v788
      %1570 = vmatmul.mubr.bf16.gmra.mxu0 %v787
      %v1571 = vpop.f32.mrf.mxu0
      %v1572 = vadd.f32 %v412, %v1571
      %v1573 = vpop.f32.mrf.mxu0
      %v1574 = vadd.f32 %v416, %v1573
      %v1575 = vpop.f32.mrf.mxu0
      %v1576 = vadd.f32 %v412, %v1575
      %v1577 = vpop.f32.mrf.mxu0
      %v1578 = vadd.f32 %v416, %v1577
      %1579 = vmatprep.mubr.bf16.mxu0 %v791
      %1580 = vmatmul.mubr.bf16.gmra.mxu0 %v790
      %v1581 = vpop.f32.mrf.mxu0
      %v1582 = vadd.f32 %v412, %v1581
      %v1583 = vpop.f32.mrf.mxu0
      %v1584 = vadd.f32 %v416, %v1583
      %v1585 = vpop.f32.mrf.mxu0
      %v1586 = vadd.f32 %v412, %v1585
      %v1587 = vpop.f32.mrf.mxu0
      %v1588 = vadd.f32 %v416, %v1587
      %1589 = vdwg.mxu0
      %1590 = vmatprep.subr.bf16.mxu0 0
      %1591 = vmatpush1.bf16.msra.mxu0 0
      %1592 = vmatprep.subr.bf16.mxu0 0
      %1593 = vmatpush1.bf16.msra.mxu0 0
      %1594 = vmatprep.subr.bf16.mxu0 0
      %1595 = vmatpush1.bf16.msra.mxu0 0
      %1596 = vmatprep.subr.bf16.mxu0 0
      %1597 = vmatpush1.bf16.msra.mxu0 0
      %1598 = vmatprep.subr.bf16.mxu0 0
      %1599 = vmatpush1.bf16.msra.mxu0 0
      %1600 = vmatprep.subr.bf16.mxu0 0
      %1601 = vmatpush1.bf16.msra.mxu0 0
      %1602 = vmatprep.subr.bf16.mxu0 0
      %1603 = vmatpush1.bf16.msra.mxu0 0
      %1604 = vmatprep.subr.bf16.mxu0 %v1269
      %1605 = vmatpush1.bf16.msra.mxu0 %v1266
      %1606 = vmatprep.subr.bf16.mxu0 0
      %1607 = vmatpush2.bf16.msra.mxu0 0
      %1608 = vmatprep.subr.bf16.mxu0 0
      %1609 = vmatpush2.bf16.msra.mxu0 0
      %1610 = vmatprep.subr.bf16.mxu0 0
      %1611 = vmatpush2.bf16.msra.mxu0 0
      %1612 = vmatprep.subr.bf16.mxu0 0
      %1613 = vmatpush2.bf16.msra.mxu0 0
      %1614 = vmatprep.subr.bf16.mxu0 0
      %1615 = vmatpush2.bf16.msra.mxu0 0
      %1616 = vmatprep.subr.bf16.mxu0 0
      %1617 = vmatpush2.bf16.msra.mxu0 0
      %1618 = vmatprep.subr.bf16.mxu0 0
      %1619 = vmatpush2.bf16.msra.mxu0 0
      %1620 = vmatprep.subr.bf16.mxu0 0
      %1621 = vmatpush2.bf16.msra.mxu0 0
      %1622 = vmatprep.mubr.bf16.mxu0 0
      %1623 = vmatmul.mubr.bf16.gmra.mxu0 %v1181
      %v1624 = vpop.f32.mrf.mxu0
      %v1625 = vadd.f32 %v1312, %v1624
      %v1626 = vpop.f32.mrf.mxu0
      %v1627 = vadd.f32 %v1314, %v1626
      %v1628 = vpop.f32.mrf.mxu0
      %v1629 = vadd.f32 %v1316, %v1628
      %v1630 = vpop.f32.mrf.mxu0
      %v1631 = vadd.f32 %v1318, %v1630
      %1632 = vmatprep.mubr.bf16.mxu0 0
      %1633 = vmatmul.mubr.bf16.gmra.mxu0 %v1184
      %v1634 = vpop.f32.mrf.mxu0
      %v1635 = vadd.f32 %v1322, %v1634
      %v1636 = vpop.f32.mrf.mxu0
      %v1637 = vadd.f32 %v1324, %v1636
      %v1638 = vpop.f32.mrf.mxu0
      %v1639 = vadd.f32 %v1326, %v1638
      %v1640 = vpop.f32.mrf.mxu0
      %v1641 = vadd.f32 %v1328, %v1640
      %1642 = vmatprep.mubr.bf16.mxu0 0
      %1643 = vmatmul.mubr.bf16.gmra.mxu0 %v1187
      %v1644 = vpop.f32.mrf.mxu0
      %v1645 = vadd.f32 %v1332, %v1644
      %v1646 = vpop.f32.mrf.mxu0
      %v1647 = vadd.f32 %v1334, %v1646
      %v1648 = vpop.f32.mrf.mxu0
      %v1649 = vadd.f32 %v1336, %v1648
      %v1650 = vpop.f32.mrf.mxu0
      %v1651 = vadd.f32 %v1338, %v1650
      %1652 = vmatprep.mubr.bf16.mxu0 0
      %1653 = vmatmul.mubr.bf16.gmra.mxu0 %v1190
      %v1654 = vpop.f32.mrf.mxu0
      %v1655 = vadd.f32 %v1342, %v1654
      %v1656 = vpop.f32.mrf.mxu0
      %v1657 = vadd.f32 %v1344, %v1656
      %v1658 = vpop.f32.mrf.mxu0
      %v1659 = vadd.f32 %v1346, %v1658
      %v1660 = vpop.f32.mrf.mxu0
      %v1661 = vadd.f32 %v1348, %v1660
      %1662 = vmatprep.mubr.bf16.mxu0 0
      %1663 = vmatmul.mubr.bf16.gmra.mxu0 %v1193
      %v1664 = vpop.f32.mrf.mxu0
      %v1665 = vadd.f32 %v1352, %v1664
      %v1666 = vpop.f32.mrf.mxu0
      %v1667 = vadd.f32 %v1354, %v1666
      %v1668 = vpop.f32.mrf.mxu0
      %v1669 = vadd.f32 %v1356, %v1668
      %v1670 = vpop.f32.mrf.mxu0
      %v1671 = vadd.f32 %v1358, %v1670
      %1672 = vmatprep.mubr.bf16.mxu0 0
      %1673 = vmatmul.mubr.bf16.gmra.mxu0 %v1196
      %v1674 = vpop.f32.mrf.mxu0
      %v1675 = vadd.f32 %v1362, %v1674
      %v1676 = vpop.f32.mrf.mxu0
      %v1677 = vadd.f32 %v1364, %v1676
      %v1678 = vpop.f32.mrf.mxu0
      %v1679 = vadd.f32 %v1366, %v1678
      %v1680 = vpop.f32.mrf.mxu0
      %v1681 = vadd.f32 %v1368, %v1680
      %1682 = vmatprep.mubr.bf16.mxu0 0
      %1683 = vmatmul.mubr.bf16.gmra.mxu0 %v1199
      %v1684 = vpop.f32.mrf.mxu0
      %v1685 = vadd.f32 %v1372, %v1684
      %v1686 = vpop.f32.mrf.mxu0
      %v1687 = vadd.f32 %v1374, %v1686
      %v1688 = vpop.f32.mrf.mxu0
      %v1689 = vadd.f32 %v1376, %v1688
      %v1690 = vpop.f32.mrf.mxu0
      %v1691 = vadd.f32 %v1378, %v1690
      %1692 = vmatprep.mubr.bf16.mxu0 0
      %1693 = vmatmul.mubr.bf16.gmra.mxu0 %v1202
      %v1694 = vpop.f32.mrf.mxu0
      %v1695 = vadd.f32 %v1382, %v1694
      %v1696 = vpop.f32.mrf.mxu0
      %v1697 = vadd.f32 %v1384, %v1696
      %v1698 = vpop.f32.mrf.mxu0
      %v1699 = vadd.f32 %v1386, %v1698
      %v1700 = vpop.f32.mrf.mxu0
      %v1701 = vadd.f32 %v1388, %v1700
      %1702 = vmatprep.mubr.bf16.mxu0 0
      %1703 = vmatmul.mubr.bf16.gmra.mxu0 %v1205
      %v1704 = vpop.f32.mrf.mxu0
      %v1705 = vadd.f32 %v1392, %v1704
      %v1706 = vpop.f32.mrf.mxu0
      %v1707 = vadd.f32 %v1394, %v1706
      %v1708 = vpop.f32.mrf.mxu0
      %v1709 = vadd.f32 %v1396, %v1708
      %v1710 = vpop.f32.mrf.mxu0
      %v1711 = vadd.f32 %v1398, %v1710
      %1712 = vmatprep.mubr.bf16.mxu0 0
      %1713 = vmatmul.mubr.bf16.gmra.mxu0 %v1208
      %v1714 = vpop.f32.mrf.mxu0
      %v1715 = vadd.f32 %v1402, %v1714
      %v1716 = vpop.f32.mrf.mxu0
      %v1717 = vadd.f32 %v1404, %v1716
      %v1718 = vpop.f32.mrf.mxu0
      %v1719 = vadd.f32 %v1406, %v1718
      %v1720 = vpop.f32.mrf.mxu0
      %v1721 = vadd.f32 %v1408, %v1720
      %1722 = vmatprep.mubr.bf16.mxu0 0
      %1723 = vmatmul.mubr.bf16.gmra.mxu0 %v1211
      %v1724 = vpop.f32.mrf.mxu0
      %v1725 = vadd.f32 %v1412, %v1724
      %v1726 = vpop.f32.mrf.mxu0
      %v1727 = vadd.f32 %v1414, %v1726
      %v1728 = vpop.f32.mrf.mxu0
      %v1729 = vadd.f32 %v1416, %v1728
      %v1730 = vpop.f32.mrf.mxu0
      %v1731 = vadd.f32 %v1418, %v1730
      %1732 = vmatprep.mubr.bf16.mxu0 0
      %1733 = vmatmul.mubr.bf16.gmra.mxu0 %v1214
      %v1734 = vpop.f32.mrf.mxu0
      %v1735 = vadd.f32 %v1422, %v1734
      %v1736 = vpop.f32.mrf.mxu0
      %v1737 = vadd.f32 %v1424, %v1736
      %v1738 = vpop.f32.mrf.mxu0
      %v1739 = vadd.f32 %v1426, %v1738
      %v1740 = vpop.f32.mrf.mxu0
      %v1741 = vadd.f32 %v1428, %v1740
      %1742 = vmatprep.mubr.bf16.mxu0 0
      %1743 = vmatmul.mubr.bf16.gmra.mxu0 %v1217
      %v1744 = vpop.f32.mrf.mxu0
      %v1745 = vadd.f32 %v1432, %v1744
      %v1746 = vpop.f32.mrf.mxu0
      %v1747 = vadd.f32 %v1434, %v1746
      %v1748 = vpop.f32.mrf.mxu0
      %v1749 = vadd.f32 %v1436, %v1748
      %v1750 = vpop.f32.mrf.mxu0
      %v1751 = vadd.f32 %v1438, %v1750
      %1752 = vmatprep.mubr.bf16.mxu0 0
      %1753 = vmatmul.mubr.bf16.gmra.mxu0 %v1220
      %v1754 = vpop.f32.mrf.mxu0
      %v1755 = vadd.f32 %v1442, %v1754
      %v1756 = vpop.f32.mrf.mxu0
      %v1757 = vadd.f32 %v1444, %v1756
      %v1758 = vpop.f32.mrf.mxu0
      %v1759 = vadd.f32 %v1446, %v1758
      %v1760 = vpop.f32.mrf.mxu0
      %v1761 = vadd.f32 %v1448, %v1760
      %1762 = vmatprep.mubr.bf16.mxu0 0
      %1763 = vmatmul.mubr.bf16.gmra.mxu0 %v1223
      %v1764 = vpop.f32.mrf.mxu0
      %v1765 = vadd.f32 %v1452, %v1764
      %v1766 = vpop.f32.mrf.mxu0
      %v1767 = vadd.f32 %v1454, %v1766
      %v1768 = vpop.f32.mrf.mxu0
      %v1769 = vadd.f32 %v1456, %v1768
      %v1770 = vpop.f32.mrf.mxu0
      %v1771 = vadd.f32 %v1458, %v1770
      %1772 = vmatprep.mubr.bf16.mxu0 0
      %1773 = vmatmul.mubr.bf16.gmra.mxu0 %v1226
      %v1774 = vpop.f32.mrf.mxu0
      %v1775 = vadd.f32 %v1462, %v1774
      %v1776 = vpop.f32.mrf.mxu0
      %v1777 = vadd.f32 %v1464, %v1776
      %v1778 = vpop.f32.mrf.mxu0
      %v1779 = vadd.f32 %v1466, %v1778
      %v1780 = vpop.f32.mrf.mxu0
      %v1781 = vadd.f32 %v1468, %v1780
      %1782 = vmatprep.mubr.bf16.mxu0 0
      %1783 = vmatmul.mubr.bf16.gmra.mxu0 %v1229
      %v1784 = vpop.f32.mrf.mxu0
      %v1785 = vadd.f32 %v1472, %v1784
      %v1786 = vpop.f32.mrf.mxu0
      %v1787 = vadd.f32 %v1474, %v1786
      %v1788 = vpop.f32.mrf.mxu0
      %v1789 = vadd.f32 %v1476, %v1788
      %v1790 = vpop.f32.mrf.mxu0
      %v1791 = vadd.f32 %v1478, %v1790
      %1792 = vmatprep.mubr.bf16.mxu0 0
      %1793 = vmatmul.mubr.bf16.gmra.mxu0 %v1232
      %v1794 = vpop.f32.mrf.mxu0
      %v1795 = vadd.f32 %v1482, %v1794
      %v1796 = vpop.f32.mrf.mxu0
      %v1797 = vadd.f32 %v1484, %v1796
      %v1798 = vpop.f32.mrf.mxu0
      %v1799 = vadd.f32 %v1486, %v1798
      %v1800 = vpop.f32.mrf.mxu0
      %v1801 = vadd.f32 %v1488, %v1800
      %1802 = vmatprep.mubr.bf16.mxu0 0
      %1803 = vmatmul.mubr.bf16.gmra.mxu0 %v1235
      %v1804 = vpop.f32.mrf.mxu0
      %v1805 = vadd.f32 %v1492, %v1804
      %v1806 = vpop.f32.mrf.mxu0
      %v1807 = vadd.f32 %v1494, %v1806
      %v1808 = vpop.f32.mrf.mxu0
      %v1809 = vadd.f32 %v1496, %v1808
      %v1810 = vpop.f32.mrf.mxu0
      %v1811 = vadd.f32 %v1498, %v1810
      %1812 = vmatprep.mubr.bf16.mxu0 0
      %1813 = vmatmul.mubr.bf16.gmra.mxu0 %v1238
      %v1814 = vpop.f32.mrf.mxu0
      %v1815 = vadd.f32 %v1502, %v1814
      %v1816 = vpop.f32.mrf.mxu0
      %v1817 = vadd.f32 %v1504, %v1816
      %v1818 = vpop.f32.mrf.mxu0
      %v1819 = vadd.f32 %v1506, %v1818
      %v1820 = vpop.f32.mrf.mxu0
      %v1821 = vadd.f32 %v1508, %v1820
      %1822 = vmatprep.mubr.bf16.mxu0 0
      %1823 = vmatmul.mubr.bf16.gmra.mxu0 %v1241
      %v1824 = vpop.f32.mrf.mxu0
      %v1825 = vadd.f32 %v1512, %v1824
      %v1826 = vpop.f32.mrf.mxu0
      %v1827 = vadd.f32 %v1514, %v1826
      %v1828 = vpop.f32.mrf.mxu0
      %v1829 = vadd.f32 %v1516, %v1828
      %v1830 = vpop.f32.mrf.mxu0
      %v1831 = vadd.f32 %v1518, %v1830
      %1832 = vmatprep.mubr.bf16.mxu0 0
      %1833 = vmatmul.mubr.bf16.gmra.mxu0 %v1244
      %v1834 = vpop.f32.mrf.mxu0
      %v1835 = vadd.f32 %v1522, %v1834
      %v1836 = vpop.f32.mrf.mxu0
      %v1837 = vadd.f32 %v1524, %v1836
      %v1838 = vpop.f32.mrf.mxu0
      %v1839 = vadd.f32 %v1526, %v1838
      %v1840 = vpop.f32.mrf.mxu0
      %v1841 = vadd.f32 %v1528, %v1840
      %1842 = vmatprep.mubr.bf16.mxu0 0
      %1843 = vmatmul.mubr.bf16.gmra.mxu0 %v1247
      %v1844 = vpop.f32.mrf.mxu0
      %v1845 = vadd.f32 %v1532, %v1844
      %v1846 = vpop.f32.mrf.mxu0
      %v1847 = vadd.f32 %v1534, %v1846
      %v1848 = vpop.f32.mrf.mxu0
      %v1849 = vadd.f32 %v1536, %v1848
      %v1850 = vpop.f32.mrf.mxu0
      %v1851 = vadd.f32 %v1538, %v1850
      %1852 = vmatprep.mubr.bf16.mxu0 0
      %1853 = vmatmul.mubr.bf16.gmra.mxu0 %v1250
      %v1854 = vpop.f32.mrf.mxu0
      %v1855 = vadd.f32 %v1542, %v1854
      %v1856 = vpop.f32.mrf.mxu0
      %v1857 = vadd.f32 %v1544, %v1856
      %v1858 = vpop.f32.mrf.mxu0
      %v1859 = vadd.f32 %v1546, %v1858
      %v1860 = vpop.f32.mrf.mxu0
      %v1861 = vadd.f32 %v1548, %v1860
      %1862 = vmatprep.mubr.bf16.mxu0 0
      %1863 = vmatmul.mubr.bf16.gmra.mxu0 %v1253
      %v1864 = vpop.f32.mrf.mxu0
      %v1865 = vadd.f32 %v1552, %v1864
      %v1866 = vpop.f32.mrf.mxu0
      %v1867 = vadd.f32 %v1554, %v1866
      %v1868 = vpop.f32.mrf.mxu0
      %v1869 = vadd.f32 %v1556, %v1868
      %v1870 = vpop.f32.mrf.mxu0
      %v1871 = vadd.f32 %v1558, %v1870
      %1872 = vmatprep.mubr.bf16.mxu0 0
      %1873 = vmatmul.mubr.bf16.gmra.mxu0 %v1256
      %v1874 = vpop.f32.mrf.mxu0
      %v1875 = vadd.f32 %v1562, %v1874
      %v1876 = vpop.f32.mrf.mxu0
      %v1877 = vadd.f32 %v1564, %v1876
      %v1878 = vpop.f32.mrf.mxu0
      %v1879 = vadd.f32 %v1566, %v1878
      %v1880 = vpop.f32.mrf.mxu0
      %v1881 = vadd.f32 %v1568, %v1880
      %1882 = vmatprep.mubr.bf16.mxu0 0
      %1883 = vmatmul.mubr.bf16.gmra.mxu0 %v1259
      %v1884 = vpop.f32.mrf.mxu0
      %v1885 = vadd.f32 %v1572, %v1884
      %v1886 = vpop.f32.mrf.mxu0
      %v1887 = vadd.f32 %v1574, %v1886
      %v1888 = vpop.f32.mrf.mxu0
      %v1889 = vadd.f32 %v1576, %v1888
      %v1890 = vpop.f32.mrf.mxu0
      %v1891 = vadd.f32 %v1578, %v1890
      %1892 = vmatprep.mubr.bf16.mxu0 0
      %1893 = vmatmul.mubr.bf16.gmra.mxu0 %v1262
      %v1894 = vpop.f32.mrf.mxu0
      %v1895 = vadd.f32 %v1582, %v1894
      %v1896 = vpop.f32.mrf.mxu0
      %v1897 = vadd.f32 %v1584, %v1896
      %v1898 = vpop.f32.mrf.mxu0
      %v1899 = vadd.f32 %v1586, %v1898
      %v1900 = vpop.f32.mrf.mxu0
      %v1901 = vadd.f32 %v1588, %v1900
      %1902 = vdwg.mxu0
      %1903 = vmatprep.subr.bf16.mxu0 %v1078
      %1904 = vmatpush1.bf16.msra.mxu0 %v1077
      %1905 = vmatprep.subr.bf16.mxu0 %v1074
      %1906 = vmatpush1.bf16.msra.mxu0 %v1073
      %1907 = vmatprep.subr.bf16.mxu0 %v1070
      %1908 = vmatpush1.bf16.msra.mxu0 %v1069
      %1909 = vmatprep.subr.bf16.mxu0 %v1066
      %1910 = vmatpush1.bf16.msra.mxu0 %v1065
      %1911 = vmatprep.subr.bf16.mxu0 %v1062
      %1912 = vmatpush1.bf16.msra.mxu0 %v1061
      %1913 = vmatprep.subr.bf16.mxu0 %v1058
      %1914 = vmatpush1.bf16.msra.mxu0 %v1057
      %1915 = vmatprep.subr.bf16.mxu0 %v1054
      %1916 = vmatpush1.bf16.msra.mxu0 %v1053
      %1917 = vmatprep.subr.bf16.mxu0 %v1050
      %1918 = vmatpush1.bf16.msra.mxu0 %v1049
      %1919 = vmatprep.subr.bf16.mxu0 %v1110
      %1920 = vmatpush2.bf16.msra.mxu0 %v1109
      %1921 = vmatprep.subr.bf16.mxu0 %v1106
      %1922 = vmatpush2.bf16.msra.mxu0 %v1105
      %1923 = vmatprep.subr.bf16.mxu0 %v1102
      %1924 = vmatpush2.bf16.msra.mxu0 %v1101
      %1925 = vmatprep.subr.bf16.mxu0 %v1098
      %1926 = vmatpush2.bf16.msra.mxu0 %v1097
      %1927 = vmatprep.subr.bf16.mxu0 %v1094
      %1928 = vmatpush2.bf16.msra.mxu0 %v1093
      %1929 = vmatprep.subr.bf16.mxu0 %v1090
      %1930 = vmatpush2.bf16.msra.mxu0 %v1089
      %1931 = vmatprep.subr.bf16.mxu0 %v1086
      %1932 = vmatpush2.bf16.msra.mxu0 %v1085
      %1933 = vmatprep.subr.bf16.mxu0 %v1082
      %1934 = vmatpush2.bf16.msra.mxu0 %v1081
      %1935 = vmatprep.mubr.bf16.mxu0 %v710
      %1936 = vmatmul.mubr.bf16.gmra.mxu0 %v709
      %v1937 = vpop.f32.mrf.mxu0
      %v1938 = vadd.f32 %v420, %v1937
      %v1939 = vpop.f32.mrf.mxu0
      %v1940 = vadd.f32 %v424, %v1939
      %v1941 = vpop.f32.mrf.mxu0
      %v1942 = vadd.f32 %v420, %v1941
      %v1943 = vpop.f32.mrf.mxu0
      %v1944 = vadd.f32 %v424, %v1943
      %1945 = vmatprep.mubr.bf16.mxu0 %v713
      %1946 = vmatmul.mubr.bf16.gmra.mxu0 %v712
      %v1947 = vpop.f32.mrf.mxu0
      %v1948 = vadd.f32 %v420, %v1947
      %v1949 = vpop.f32.mrf.mxu0
      %v1950 = vadd.f32 %v424, %v1949
      %v1951 = vpop.f32.mrf.mxu0
      %v1952 = vadd.f32 %v420, %v1951
      %v1953 = vpop.f32.mrf.mxu0
      %v1954 = vadd.f32 %v424, %v1953
      %1955 = vmatprep.mubr.bf16.mxu0 %v716
      %1956 = vmatmul.mubr.bf16.gmra.mxu0 %v715
      %v1957 = vpop.f32.mrf.mxu0
      %v1958 = vadd.f32 %v420, %v1957
      %v1959 = vpop.f32.mrf.mxu0
      %v1960 = vadd.f32 %v424, %v1959
      %v1961 = vpop.f32.mrf.mxu0
      %v1962 = vadd.f32 %v420, %v1961
      %v1963 = vpop.f32.mrf.mxu0
      %v1964 = vadd.f32 %v424, %v1963
      %1965 = vmatprep.mubr.bf16.mxu0 %v719
      %1966 = vmatmul.mubr.bf16.gmra.mxu0 %v718
      %v1967 = vpop.f32.mrf.mxu0
      %v1968 = vadd.f32 %v420, %v1967
      %v1969 = vpop.f32.mrf.mxu0
      %v1970 = vadd.f32 %v424, %v1969
      %v1971 = vpop.f32.mrf.mxu0
      %v1972 = vadd.f32 %v420, %v1971
      %v1973 = vpop.f32.mrf.mxu0
      %v1974 = vadd.f32 %v424, %v1973
      %1975 = vmatprep.mubr.bf16.mxu0 %v722
      %1976 = vmatmul.mubr.bf16.gmra.mxu0 %v721
      %v1977 = vpop.f32.mrf.mxu0
      %v1978 = vadd.f32 %v420, %v1977
      %v1979 = vpop.f32.mrf.mxu0
      %v1980 = vadd.f32 %v424, %v1979
      %v1981 = vpop.f32.mrf.mxu0
      %v1982 = vadd.f32 %v420, %v1981
      %v1983 = vpop.f32.mrf.mxu0
      %v1984 = vadd.f32 %v424, %v1983
      %1985 = vmatprep.mubr.bf16.mxu0 %v725
      %1986 = vmatmul.mubr.bf16.gmra.mxu0 %v724
      %v1987 = vpop.f32.mrf.mxu0
      %v1988 = vadd.f32 %v420, %v1987
      %v1989 = vpop.f32.mrf.mxu0
      %v1990 = vadd.f32 %v424, %v1989
      %v1991 = vpop.f32.mrf.mxu0
      %v1992 = vadd.f32 %v420, %v1991
      %v1993 = vpop.f32.mrf.mxu0
      %v1994 = vadd.f32 %v424, %v1993
      %1995 = vmatprep.mubr.bf16.mxu0 %v728
      %1996 = vmatmul.mubr.bf16.gmra.mxu0 %v727
      %v1997 = vpop.f32.mrf.mxu0
      %v1998 = vadd.f32 %v420, %v1997
      %v1999 = vpop.f32.mrf.mxu0
      %v2000 = vadd.f32 %v424, %v1999
      %v2001 = vpop.f32.mrf.mxu0
      %v2002 = vadd.f32 %v420, %v2001
      %v2003 = vpop.f32.mrf.mxu0
      %v2004 = vadd.f32 %v424, %v2003
      %2005 = vmatprep.mubr.bf16.mxu0 %v731
      %2006 = vmatmul.mubr.bf16.gmra.mxu0 %v730
      %v2007 = vpop.f32.mrf.mxu0
      %v2008 = vadd.f32 %v420, %v2007
      %v2009 = vpop.f32.mrf.mxu0
      %v2010 = vadd.f32 %v424, %v2009
      %v2011 = vpop.f32.mrf.mxu0
      %v2012 = vadd.f32 %v420, %v2011
      %v2013 = vpop.f32.mrf.mxu0
      %v2014 = vadd.f32 %v424, %v2013
      %2015 = vmatprep.mubr.bf16.mxu0 %v734
      %2016 = vmatmul.mubr.bf16.gmra.mxu0 %v733
      %v2017 = vpop.f32.mrf.mxu0
      %v2018 = vadd.f32 %v420, %v2017
      %v2019 = vpop.f32.mrf.mxu0
      %v2020 = vadd.f32 %v424, %v2019
      %v2021 = vpop.f32.mrf.mxu0
      %v2022 = vadd.f32 %v420, %v2021
      %v2023 = vpop.f32.mrf.mxu0
      %v2024 = vadd.f32 %v424, %v2023
      %2025 = vmatprep.mubr.bf16.mxu0 %v737
      %2026 = vmatmul.mubr.bf16.gmra.mxu0 %v736
      %v2027 = vpop.f32.mrf.mxu0
      %v2028 = vadd.f32 %v420, %v2027
      %v2029 = vpop.f32.mrf.mxu0
      %v2030 = vadd.f32 %v424, %v2029
      %v2031 = vpop.f32.mrf.mxu0
      %v2032 = vadd.f32 %v420, %v2031
      %v2033 = vpop.f32.mrf.mxu0
      %v2034 = vadd.f32 %v424, %v2033
      %2035 = vmatprep.mubr.bf16.mxu0 %v740
      %2036 = vmatmul.mubr.bf16.gmra.mxu0 %v739
      %v2037 = vpop.f32.mrf.mxu0
      %v2038 = vadd.f32 %v420, %v2037
      %v2039 = vpop.f32.mrf.mxu0
      %v2040 = vadd.f32 %v424, %v2039
      %v2041 = vpop.f32.mrf.mxu0
      %v2042 = vadd.f32 %v420, %v2041
      %v2043 = vpop.f32.mrf.mxu0
      %v2044 = vadd.f32 %v424, %v2043
      %2045 = vmatprep.mubr.bf16.mxu0 %v743
      %2046 = vmatmul.mubr.bf16.gmra.mxu0 %v742
      %v2047 = vpop.f32.mrf.mxu0
      %v2048 = vadd.f32 %v420, %v2047
      %v2049 = vpop.f32.mrf.mxu0
      %v2050 = vadd.f32 %v424, %v2049
      %v2051 = vpop.f32.mrf.mxu0
      %v2052 = vadd.f32 %v420, %v2051
      %v2053 = vpop.f32.mrf.mxu0
      %v2054 = vadd.f32 %v424, %v2053
      %2055 = vmatprep.mubr.bf16.mxu0 %v746
      %2056 = vmatmul.mubr.bf16.gmra.mxu0 %v745
      %v2057 = vpop.f32.mrf.mxu0
      %v2058 = vadd.f32 %v420, %v2057
      %v2059 = vpop.f32.mrf.mxu0
      %v2060 = vadd.f32 %v424, %v2059
      %v2061 = vpop.f32.mrf.mxu0
      %v2062 = vadd.f32 %v420, %v2061
      %v2063 = vpop.f32.mrf.mxu0
      %v2064 = vadd.f32 %v424, %v2063
      %2065 = vmatprep.mubr.bf16.mxu0 %v749
      %2066 = vmatmul.mubr.bf16.gmra.mxu0 %v748
      %v2067 = vpop.f32.mrf.mxu0
      %v2068 = vadd.f32 %v420, %v2067
      %v2069 = vpop.f32.mrf.mxu0
      %v2070 = vadd.f32 %v424, %v2069
      %v2071 = vpop.f32.mrf.mxu0
      %v2072 = vadd.f32 %v420, %v2071
      %v2073 = vpop.f32.mrf.mxu0
      %v2074 = vadd.f32 %v424, %v2073
      %2075 = vmatprep.mubr.bf16.mxu0 %v752
      %2076 = vmatmul.mubr.bf16.gmra.mxu0 %v751
      %v2077 = vpop.f32.mrf.mxu0
      %v2078 = vadd.f32 %v420, %v2077
      %v2079 = vpop.f32.mrf.mxu0
      %v2080 = vadd.f32 %v424, %v2079
      %v2081 = vpop.f32.mrf.mxu0
      %v2082 = vadd.f32 %v420, %v2081
      %v2083 = vpop.f32.mrf.mxu0
      %v2084 = vadd.f32 %v424, %v2083
      %2085 = vmatprep.mubr.bf16.mxu0 %v755
      %2086 = vmatmul.mubr.bf16.gmra.mxu0 %v754
      %v2087 = vpop.f32.mrf.mxu0
      %v2088 = vadd.f32 %v420, %v2087
      %v2089 = vpop.f32.mrf.mxu0
      %v2090 = vadd.f32 %v424, %v2089
      %v2091 = vpop.f32.mrf.mxu0
      %v2092 = vadd.f32 %v420, %v2091
      %v2093 = vpop.f32.mrf.mxu0
      %v2094 = vadd.f32 %v424, %v2093
      %2095 = vmatprep.mubr.bf16.mxu0 %v758
      %2096 = vmatmul.mubr.bf16.gmra.mxu0 %v757
      %v2097 = vpop.f32.mrf.mxu0
      %v2098 = vadd.f32 %v420, %v2097
      %v2099 = vpop.f32.mrf.mxu0
      %v2100 = vadd.f32 %v424, %v2099
      %v2101 = vpop.f32.mrf.mxu0
      %v2102 = vadd.f32 %v420, %v2101
      %v2103 = vpop.f32.mrf.mxu0
      %v2104 = vadd.f32 %v424, %v2103
      %2105 = vmatprep.mubr.bf16.mxu0 %v761
      %2106 = vmatmul.mubr.bf16.gmra.mxu0 %v760
      %v2107 = vpop.f32.mrf.mxu0
      %v2108 = vadd.f32 %v420, %v2107
      %v2109 = vpop.f32.mrf.mxu0
      %v2110 = vadd.f32 %v424, %v2109
      %v2111 = vpop.f32.mrf.mxu0
      %v2112 = vadd.f32 %v420, %v2111
      %v2113 = vpop.f32.mrf.mxu0
      %v2114 = vadd.f32 %v424, %v2113
      %2115 = vmatprep.mubr.bf16.mxu0 %v764
      %2116 = vmatmul.mubr.bf16.gmra.mxu0 %v763
      %v2117 = vpop.f32.mrf.mxu0
      %v2118 = vadd.f32 %v420, %v2117
      %v2119 = vpop.f32.mrf.mxu0
      %v2120 = vadd.f32 %v424, %v2119
      %v2121 = vpop.f32.mrf.mxu0
      %v2122 = vadd.f32 %v420, %v2121
      %v2123 = vpop.f32.mrf.mxu0
      %v2124 = vadd.f32 %v424, %v2123
      %2125 = vmatprep.mubr.bf16.mxu0 %v767
      %2126 = vmatmul.mubr.bf16.gmra.mxu0 %v766
      %v2127 = vpop.f32.mrf.mxu0
      %v2128 = vadd.f32 %v420, %v2127
      %v2129 = vpop.f32.mrf.mxu0
      %v2130 = vadd.f32 %v424, %v2129
      %v2131 = vpop.f32.mrf.mxu0
      %v2132 = vadd.f32 %v420, %v2131
      %v2133 = vpop.f32.mrf.mxu0
      %v2134 = vadd.f32 %v424, %v2133
      %2135 = vmatprep.mubr.bf16.mxu0 %v770
      %2136 = vmatmul.mubr.bf16.gmra.mxu0 %v769
      %v2137 = vpop.f32.mrf.mxu0
      %v2138 = vadd.f32 %v420, %v2137
      %v2139 = vpop.f32.mrf.mxu0
      %v2140 = vadd.f32 %v424, %v2139
      %v2141 = vpop.f32.mrf.mxu0
      %v2142 = vadd.f32 %v420, %v2141
      %v2143 = vpop.f32.mrf.mxu0
      %v2144 = vadd.f32 %v424, %v2143
      %2145 = vmatprep.mubr.bf16.mxu0 %v773
      %2146 = vmatmul.mubr.bf16.gmra.mxu0 %v772
      %v2147 = vpop.f32.mrf.mxu0
      %v2148 = vadd.f32 %v420, %v2147
      %v2149 = vpop.f32.mrf.mxu0
      %v2150 = vadd.f32 %v424, %v2149
      %v2151 = vpop.f32.mrf.mxu0
      %v2152 = vadd.f32 %v420, %v2151
      %v2153 = vpop.f32.mrf.mxu0
      %v2154 = vadd.f32 %v424, %v2153
      %2155 = vmatprep.mubr.bf16.mxu0 %v776
      %2156 = vmatmul.mubr.bf16.gmra.mxu0 %v775
      %v2157 = vpop.f32.mrf.mxu0
      %v2158 = vadd.f32 %v420, %v2157
      %v2159 = vpop.f32.mrf.mxu0
      %v2160 = vadd.f32 %v424, %v2159
      %v2161 = vpop.f32.mrf.mxu0
      %v2162 = vadd.f32 %v420, %v2161
      %v2163 = vpop.f32.mrf.mxu0
      %v2164 = vadd.f32 %v424, %v2163
      %2165 = vmatprep.mubr.bf16.mxu0 %v779
      %2166 = vmatmul.mubr.bf16.gmra.mxu0 %v778
      %v2167 = vpop.f32.mrf.mxu0
      %v2168 = vadd.f32 %v420, %v2167
      %v2169 = vpop.f32.mrf.mxu0
      %v2170 = vadd.f32 %v424, %v2169
      %v2171 = vpop.f32.mrf.mxu0
      %v2172 = vadd.f32 %v420, %v2171
      %v2173 = vpop.f32.mrf.mxu0
      %v2174 = vadd.f32 %v424, %v2173
      %2175 = vmatprep.mubr.bf16.mxu0 %v782
      %2176 = vmatmul.mubr.bf16.gmra.mxu0 %v781
      %v2177 = vpop.f32.mrf.mxu0
      %v2178 = vadd.f32 %v420, %v2177
      %v2179 = vpop.f32.mrf.mxu0
      %v2180 = vadd.f32 %v424, %v2179
      %v2181 = vpop.f32.mrf.mxu0
      %v2182 = vadd.f32 %v420, %v2181
      %v2183 = vpop.f32.mrf.mxu0
      %v2184 = vadd.f32 %v424, %v2183
      %2185 = vmatprep.mubr.bf16.mxu0 %v785
      %2186 = vmatmul.mubr.bf16.gmra.mxu0 %v784
      %v2187 = vpop.f32.mrf.mxu0
      %v2188 = vadd.f32 %v420, %v2187
      %v2189 = vpop.f32.mrf.mxu0
      %v2190 = vadd.f32 %v424, %v2189
      %v2191 = vpop.f32.mrf.mxu0
      %v2192 = vadd.f32 %v420, %v2191
      %v2193 = vpop.f32.mrf.mxu0
      %v2194 = vadd.f32 %v424, %v2193
      %2195 = vmatprep.mubr.bf16.mxu0 %v788
      %2196 = vmatmul.mubr.bf16.gmra.mxu0 %v787
      %v2197 = vpop.f32.mrf.mxu0
      %v2198 = vadd.f32 %v420, %v2197
      %v2199 = vpop.f32.mrf.mxu0
      %v2200 = vadd.f32 %v424, %v2199
      %v2201 = vpop.f32.mrf.mxu0
      %v2202 = vadd.f32 %v420, %v2201
      %v2203 = vpop.f32.mrf.mxu0
      %v2204 = vadd.f32 %v424, %v2203
      %2205 = vmatprep.mubr.bf16.mxu0 %v791
      %2206 = vmatmul.mubr.bf16.gmra.mxu0 %v790
      %v2207 = vpop.f32.mrf.mxu0
      %v2208 = vadd.f32 %v420, %v2207
      %v2209 = vpop.f32.mrf.mxu0
      %v2210 = vadd.f32 %v424, %v2209
      %v2211 = vpop.f32.mrf.mxu0
      %v2212 = vadd.f32 %v420, %v2211
      %v2213 = vpop.f32.mrf.mxu0
      %v2214 = vadd.f32 %v424, %v2213
      %2215 = vdwg.mxu0
      %2216 = vmatprep.subr.bf16.mxu0 0
      %2217 = vmatpush1.bf16.msra.mxu0 0
      %2218 = vmatprep.subr.bf16.mxu0 0
      %2219 = vmatpush1.bf16.msra.mxu0 0
      %2220 = vmatprep.subr.bf16.mxu0 0
      %2221 = vmatpush1.bf16.msra.mxu0 0
      %2222 = vmatprep.subr.bf16.mxu0 0
      %2223 = vmatpush1.bf16.msra.mxu0 0
      %2224 = vmatprep.subr.bf16.mxu0 0
      %2225 = vmatpush1.bf16.msra.mxu0 0
      %2226 = vmatprep.subr.bf16.mxu0 0
      %2227 = vmatpush1.bf16.msra.mxu0 0
      %2228 = vmatprep.subr.bf16.mxu0 0
      %2229 = vmatpush1.bf16.msra.mxu0 0
      %2230 = vmatprep.subr.bf16.mxu0 %v1275
      %2231 = vmatpush1.bf16.msra.mxu0 %v1272
      %2232 = vmatprep.subr.bf16.mxu0 0
      %2233 = vmatpush2.bf16.msra.mxu0 0
      %2234 = vmatprep.subr.bf16.mxu0 0
      %2235 = vmatpush2.bf16.msra.mxu0 0
      %2236 = vmatprep.subr.bf16.mxu0 0
      %2237 = vmatpush2.bf16.msra.mxu0 0
      %2238 = vmatprep.subr.bf16.mxu0 0
      %2239 = vmatpush2.bf16.msra.mxu0 0
      %2240 = vmatprep.subr.bf16.mxu0 0
      %2241 = vmatpush2.bf16.msra.mxu0 0
      %2242 = vmatprep.subr.bf16.mxu0 0
      %2243 = vmatpush2.bf16.msra.mxu0 0
      %2244 = vmatprep.subr.bf16.mxu0 0
      %2245 = vmatpush2.bf16.msra.mxu0 0
      %2246 = vmatprep.subr.bf16.mxu0 0
      %2247 = vmatpush2.bf16.msra.mxu0 0
      %2248 = vmatprep.mubr.bf16.mxu0 0
      %2249 = vmatmul.mubr.bf16.gmra.mxu0 %v1181
      %v2250 = vpop.f32.mrf.mxu0
      %v2251 = vadd.f32 %v1938, %v2250
      %v2252 = vpop.f32.mrf.mxu0
      %v2253 = vadd.f32 %v1940, %v2252
      %v2254 = vpop.f32.mrf.mxu0
      %v2255 = vadd.f32 %v1942, %v2254
      %v2256 = vpop.f32.mrf.mxu0
      %v2257 = vadd.f32 %v1944, %v2256
      %2258 = vmatprep.mubr.bf16.mxu0 0
      %2259 = vmatmul.mubr.bf16.gmra.mxu0 %v1184
      %v2260 = vpop.f32.mrf.mxu0
      %v2261 = vadd.f32 %v1948, %v2260
      %v2262 = vpop.f32.mrf.mxu0
      %v2263 = vadd.f32 %v1950, %v2262
      %v2264 = vpop.f32.mrf.mxu0
      %v2265 = vadd.f32 %v1952, %v2264
      %v2266 = vpop.f32.mrf.mxu0
      %v2267 = vadd.f32 %v1954, %v2266
      %2268 = vmatprep.mubr.bf16.mxu0 0
      %2269 = vmatmul.mubr.bf16.gmra.mxu0 %v1187
      %v2270 = vpop.f32.mrf.mxu0
      %v2271 = vadd.f32 %v1958, %v2270
      %v2272 = vpop.f32.mrf.mxu0
      %v2273 = vadd.f32 %v1960, %v2272
      %v2274 = vpop.f32.mrf.mxu0
      %v2275 = vadd.f32 %v1962, %v2274
      %v2276 = vpop.f32.mrf.mxu0
      %v2277 = vadd.f32 %v1964, %v2276
      %2278 = vmatprep.mubr.bf16.mxu0 0
      %2279 = vmatmul.mubr.bf16.gmra.mxu0 %v1190
      %v2280 = vpop.f32.mrf.mxu0
      %v2281 = vadd.f32 %v1968, %v2280
      %v2282 = vpop.f32.mrf.mxu0
      %v2283 = vadd.f32 %v1970, %v2282
      %v2284 = vpop.f32.mrf.mxu0
      %v2285 = vadd.f32 %v1972, %v2284
      %v2286 = vpop.f32.mrf.mxu0
      %v2287 = vadd.f32 %v1974, %v2286
      %2288 = vmatprep.mubr.bf16.mxu0 0
      %2289 = vmatmul.mubr.bf16.gmra.mxu0 %v1193
      %v2290 = vpop.f32.mrf.mxu0
      %v2291 = vadd.f32 %v1978, %v2290
      %v2292 = vpop.f32.mrf.mxu0
      %v2293 = vadd.f32 %v1980, %v2292
      %v2294 = vpop.f32.mrf.mxu0
      %v2295 = vadd.f32 %v1982, %v2294
      %v2296 = vpop.f32.mrf.mxu0
      %v2297 = vadd.f32 %v1984, %v2296
      %2298 = vmatprep.mubr.bf16.mxu0 0
      %2299 = vmatmul.mubr.bf16.gmra.mxu0 %v1196
      %v2300 = vpop.f32.mrf.mxu0
      %v2301 = vadd.f32 %v1988, %v2300
      %v2302 = vpop.f32.mrf.mxu0
      %v2303 = vadd.f32 %v1990, %v2302
      %v2304 = vpop.f32.mrf.mxu0
      %v2305 = vadd.f32 %v1992, %v2304
      %v2306 = vpop.f32.mrf.mxu0
      %v2307 = vadd.f32 %v1994, %v2306
      %2308 = vmatprep.mubr.bf16.mxu0 0
      %2309 = vmatmul.mubr.bf16.gmra.mxu0 %v1199
      %v2310 = vpop.f32.mrf.mxu0
      %v2311 = vadd.f32 %v1998, %v2310
      %v2312 = vpop.f32.mrf.mxu0
      %v2313 = vadd.f32 %v2000, %v2312
      %v2314 = vpop.f32.mrf.mxu0
      %v2315 = vadd.f32 %v2002, %v2314
      %v2316 = vpop.f32.mrf.mxu0
      %v2317 = vadd.f32 %v2004, %v2316
      %2318 = vmatprep.mubr.bf16.mxu0 0
      %2319 = vmatmul.mubr.bf16.gmra.mxu0 %v1202
      %v2320 = vpop.f32.mrf.mxu0
      %v2321 = vadd.f32 %v2008, %v2320
      %v2322 = vpop.f32.mrf.mxu0
      %v2323 = vadd.f32 %v2010, %v2322
      %v2324 = vpop.f32.mrf.mxu0
      %v2325 = vadd.f32 %v2012, %v2324
      %v2326 = vpop.f32.mrf.mxu0
      %v2327 = vadd.f32 %v2014, %v2326
      %2328 = vmatprep.mubr.bf16.mxu0 0
      %2329 = vmatmul.mubr.bf16.gmra.mxu0 %v1205
      %v2330 = vpop.f32.mrf.mxu0
      %v2331 = vadd.f32 %v2018, %v2330
      %v2332 = vpop.f32.mrf.mxu0
      %v2333 = vadd.f32 %v2020, %v2332
      %v2334 = vpop.f32.mrf.mxu0
      %v2335 = vadd.f32 %v2022, %v2334
      %v2336 = vpop.f32.mrf.mxu0
      %v2337 = vadd.f32 %v2024, %v2336
      %2338 = vmatprep.mubr.bf16.mxu0 0
      %2339 = vmatmul.mubr.bf16.gmra.mxu0 %v1208
      %v2340 = vpop.f32.mrf.mxu0
      %v2341 = vadd.f32 %v2028, %v2340
      %v2342 = vpop.f32.mrf.mxu0
      %v2343 = vadd.f32 %v2030, %v2342
      %v2344 = vpop.f32.mrf.mxu0
      %v2345 = vadd.f32 %v2032, %v2344
      %v2346 = vpop.f32.mrf.mxu0
      %v2347 = vadd.f32 %v2034, %v2346
      %2348 = vmatprep.mubr.bf16.mxu0 0
      %2349 = vmatmul.mubr.bf16.gmra.mxu0 %v1211
      %v2350 = vpop.f32.mrf.mxu0
      %v2351 = vadd.f32 %v2038, %v2350
      %v2352 = vpop.f32.mrf.mxu0
      %v2353 = vadd.f32 %v2040, %v2352
      %v2354 = vpop.f32.mrf.mxu0
      %v2355 = vadd.f32 %v2042, %v2354
      %v2356 = vpop.f32.mrf.mxu0
      %v2357 = vadd.f32 %v2044, %v2356
      %2358 = vmatprep.mubr.bf16.mxu0 0
      %2359 = vmatmul.mubr.bf16.gmra.mxu0 %v1214
      %v2360 = vpop.f32.mrf.mxu0
      %v2361 = vadd.f32 %v2048, %v2360
      %v2362 = vpop.f32.mrf.mxu0
      %v2363 = vadd.f32 %v2050, %v2362
      %v2364 = vpop.f32.mrf.mxu0
      %v2365 = vadd.f32 %v2052, %v2364
      %v2366 = vpop.f32.mrf.mxu0
      %v2367 = vadd.f32 %v2054, %v2366
      %2368 = vmatprep.mubr.bf16.mxu0 0
      %2369 = vmatmul.mubr.bf16.gmra.mxu0 %v1217
      %v2370 = vpop.f32.mrf.mxu0
      %v2371 = vadd.f32 %v2058, %v2370
      %v2372 = vpop.f32.mrf.mxu0
      %v2373 = vadd.f32 %v2060, %v2372
      %v2374 = vpop.f32.mrf.mxu0
      %v2375 = vadd.f32 %v2062, %v2374
      %v2376 = vpop.f32.mrf.mxu0
      %v2377 = vadd.f32 %v2064, %v2376
      %2378 = vmatprep.mubr.bf16.mxu0 0
      %2379 = vmatmul.mubr.bf16.gmra.mxu0 %v1220
      %v2380 = vpop.f32.mrf.mxu0
      %v2381 = vadd.f32 %v2068, %v2380
      %v2382 = vpop.f32.mrf.mxu0
      %v2383 = vadd.f32 %v2070, %v2382
      %v2384 = vpop.f32.mrf.mxu0
      %v2385 = vadd.f32 %v2072, %v2384
      %v2386 = vpop.f32.mrf.mxu0
      %v2387 = vadd.f32 %v2074, %v2386
      %2388 = vmatprep.mubr.bf16.mxu0 0
      %2389 = vmatmul.mubr.bf16.gmra.mxu0 %v1223
      %v2390 = vpop.f32.mrf.mxu0
      %v2391 = vadd.f32 %v2078, %v2390
      %v2392 = vpop.f32.mrf.mxu0
      %v2393 = vadd.f32 %v2080, %v2392
      %v2394 = vpop.f32.mrf.mxu0
      %v2395 = vadd.f32 %v2082, %v2394
      %v2396 = vpop.f32.mrf.mxu0
      %v2397 = vadd.f32 %v2084, %v2396
      %2398 = vmatprep.mubr.bf16.mxu0 0
      %2399 = vmatmul.mubr.bf16.gmra.mxu0 %v1226
      %v2400 = vpop.f32.mrf.mxu0
      %v2401 = vadd.f32 %v2088, %v2400
      %v2402 = vpop.f32.mrf.mxu0
      %v2403 = vadd.f32 %v2090, %v2402
      %v2404 = vpop.f32.mrf.mxu0
      %v2405 = vadd.f32 %v2092, %v2404
      %v2406 = vpop.f32.mrf.mxu0
      %v2407 = vadd.f32 %v2094, %v2406
      %2408 = vmatprep.mubr.bf16.mxu0 0
      %2409 = vmatmul.mubr.bf16.gmra.mxu0 %v1229
      %v2410 = vpop.f32.mrf.mxu0
      %v2411 = vadd.f32 %v2098, %v2410
      %v2412 = vpop.f32.mrf.mxu0
      %v2413 = vadd.f32 %v2100, %v2412
      %v2414 = vpop.f32.mrf.mxu0
      %v2415 = vadd.f32 %v2102, %v2414
      %v2416 = vpop.f32.mrf.mxu0
      %v2417 = vadd.f32 %v2104, %v2416
      %2418 = vmatprep.mubr.bf16.mxu0 0
      %2419 = vmatmul.mubr.bf16.gmra.mxu0 %v1232
      %v2420 = vpop.f32.mrf.mxu0
      %v2421 = vadd.f32 %v2108, %v2420
      %v2422 = vpop.f32.mrf.mxu0
      %v2423 = vadd.f32 %v2110, %v2422
      %v2424 = vpop.f32.mrf.mxu0
      %v2425 = vadd.f32 %v2112, %v2424
      %v2426 = vpop.f32.mrf.mxu0
      %v2427 = vadd.f32 %v2114, %v2426
      %2428 = vmatprep.mubr.bf16.mxu0 0
      %2429 = vmatmul.mubr.bf16.gmra.mxu0 %v1235
      %v2430 = vpop.f32.mrf.mxu0
      %v2431 = vadd.f32 %v2118, %v2430
      %v2432 = vpop.f32.mrf.mxu0
      %v2433 = vadd.f32 %v2120, %v2432
      %v2434 = vpop.f32.mrf.mxu0
      %v2435 = vadd.f32 %v2122, %v2434
      %v2436 = vpop.f32.mrf.mxu0
      %v2437 = vadd.f32 %v2124, %v2436
      %2438 = vmatprep.mubr.bf16.mxu0 0
      %2439 = vmatmul.mubr.bf16.gmra.mxu0 %v1238
      %v2440 = vpop.f32.mrf.mxu0
      %v2441 = vadd.f32 %v2128, %v2440
      %v2442 = vpop.f32.mrf.mxu0
      %v2443 = vadd.f32 %v2130, %v2442
      %v2444 = vpop.f32.mrf.mxu0
      %v2445 = vadd.f32 %v2132, %v2444
      %v2446 = vpop.f32.mrf.mxu0
      %v2447 = vadd.f32 %v2134, %v2446
      %2448 = vmatprep.mubr.bf16.mxu0 0
      %2449 = vmatmul.mubr.bf16.gmra.mxu0 %v1241
      %v2450 = vpop.f32.mrf.mxu0
      %v2451 = vadd.f32 %v2138, %v2450
      %v2452 = vpop.f32.mrf.mxu0
      %v2453 = vadd.f32 %v2140, %v2452
      %v2454 = vpop.f32.mrf.mxu0
      %v2455 = vadd.f32 %v2142, %v2454
      %v2456 = vpop.f32.mrf.mxu0
      %v2457 = vadd.f32 %v2144, %v2456
      %2458 = vmatprep.mubr.bf16.mxu0 0
      %2459 = vmatmul.mubr.bf16.gmra.mxu0 %v1244
      %v2460 = vpop.f32.mrf.mxu0
      %v2461 = vadd.f32 %v2148, %v2460
      %v2462 = vpop.f32.mrf.mxu0
      %v2463 = vadd.f32 %v2150, %v2462
      %v2464 = vpop.f32.mrf.mxu0
      %v2465 = vadd.f32 %v2152, %v2464
      %v2466 = vpop.f32.mrf.mxu0
      %v2467 = vadd.f32 %v2154, %v2466
      %2468 = vmatprep.mubr.bf16.mxu0 0
      %2469 = vmatmul.mubr.bf16.gmra.mxu0 %v1247
      %v2470 = vpop.f32.mrf.mxu0
      %v2471 = vadd.f32 %v2158, %v2470
      %v2472 = vpop.f32.mrf.mxu0
      %v2473 = vadd.f32 %v2160, %v2472
      %v2474 = vpop.f32.mrf.mxu0
      %v2475 = vadd.f32 %v2162, %v2474
      %v2476 = vpop.f32.mrf.mxu0
      %v2477 = vadd.f32 %v2164, %v2476
      %2478 = vmatprep.mubr.bf16.mxu0 0
      %2479 = vmatmul.mubr.bf16.gmra.mxu0 %v1250
      %v2480 = vpop.f32.mrf.mxu0
      %v2481 = vadd.f32 %v2168, %v2480
      %v2482 = vpop.f32.mrf.mxu0
      %v2483 = vadd.f32 %v2170, %v2482
      %v2484 = vpop.f32.mrf.mxu0
      %v2485 = vadd.f32 %v2172, %v2484
      %v2486 = vpop.f32.mrf.mxu0
      %v2487 = vadd.f32 %v2174, %v2486
      %2488 = vmatprep.mubr.bf16.mxu0 0
      %2489 = vmatmul.mubr.bf16.gmra.mxu0 %v1253
      %v2490 = vpop.f32.mrf.mxu0
      %v2491 = vadd.f32 %v2178, %v2490
      %v2492 = vpop.f32.mrf.mxu0
      %v2493 = vadd.f32 %v2180, %v2492
      %v2494 = vpop.f32.mrf.mxu0
      %v2495 = vadd.f32 %v2182, %v2494
      %v2496 = vpop.f32.mrf.mxu0
      %v2497 = vadd.f32 %v2184, %v2496
      %2498 = vmatprep.mubr.bf16.mxu0 0
      %2499 = vmatmul.mubr.bf16.gmra.mxu0 %v1256
      %v2500 = vpop.f32.mrf.mxu0
      %v2501 = vadd.f32 %v2188, %v2500
      %v2502 = vpop.f32.mrf.mxu0
      %v2503 = vadd.f32 %v2190, %v2502
      %v2504 = vpop.f32.mrf.mxu0
      %v2505 = vadd.f32 %v2192, %v2504
      %v2506 = vpop.f32.mrf.mxu0
      %v2507 = vadd.f32 %v2194, %v2506
      %2508 = vmatprep.mubr.bf16.mxu0 0
      %2509 = vmatmul.mubr.bf16.gmra.mxu0 %v1259
      %v2510 = vpop.f32.mrf.mxu0
      %v2511 = vadd.f32 %v2198, %v2510
      %v2512 = vpop.f32.mrf.mxu0
      %v2513 = vadd.f32 %v2200, %v2512
      %v2514 = vpop.f32.mrf.mxu0
      %v2515 = vadd.f32 %v2202, %v2514
      %v2516 = vpop.f32.mrf.mxu0
      %v2517 = vadd.f32 %v2204, %v2516
      %2518 = vmatprep.mubr.bf16.mxu0 0
      %2519 = vmatmul.mubr.bf16.gmra.mxu0 %v1262
      %v2520 = vpop.f32.mrf.mxu0
      %v2521 = vadd.f32 %v2208, %v2520
      %v2522 = vpop.f32.mrf.mxu0
      %v2523 = vadd.f32 %v2210, %v2522
      %v2524 = vpop.f32.mrf.mxu0
      %v2525 = vadd.f32 %v2212, %v2524
      %v2526 = vpop.f32.mrf.mxu0
      %v2527 = vadd.f32 %v2214, %v2526
      %2528 = vdwg.mxu0
      %v2529 = vmax.f32 %v1625, 0.0
      %v2530 = vmax.f32 %v1627, 0.0
      %v2531 = vmax.f32 %v2251, 0.0
      %v2532 = vmax.f32 %v2253, 0.0
      %v2533 = vmax.f32 %v1629, 0.0
      %v2534 = vmax.f32 %v1631, 0.0
      %v2535 = vmax.f32 %v2255, 0.0
      %v2536 = vmax.f32 %v2257, 0.0
      %v2537 = vmax.f32 %v1635, 0.0
      %v2538 = vmax.f32 %v1637, 0.0
      %v2539 = vmax.f32 %v2261, 0.0
      %v2540 = vmax.f32 %v2263, 0.0
      %v2541 = vmax.f32 %v1639, 0.0
      %v2542 = vmax.f32 %v1641, 0.0
      %v2543 = vmax.f32 %v2265, 0.0
      %v2544 = vmax.f32 %v2267, 0.0
      %v2545 = vmax.f32 %v1645, 0.0
      %v2546 = vmax.f32 %v1647, 0.0
      %v2547 = vmax.f32 %v2271, 0.0
      %v2548 = vmax.f32 %v2273, 0.0
      %v2549 = vmax.f32 %v1649, 0.0
      %v2550 = vmax.f32 %v1651, 0.0
      %v2551 = vmax.f32 %v2275, 0.0
      %v2552 = vmax.f32 %v2277, 0.0
      %v2553 = vmax.f32 %v1655, 0.0
      %v2554 = vmax.f32 %v1657, 0.0
      %v2555 = vmax.f32 %v2281, 0.0
      %v2556 = vmax.f32 %v2283, 0.0
      %v2557 = vmax.f32 %v1659, 0.0
      %v2558 = vmax.f32 %v1661, 0.0
      %v2559 = vmax.f32 %v2285, 0.0
      %v2560 = vmax.f32 %v2287, 0.0
      %v2561 = vmax.f32 %v1665, 0.0
      %v2562 = vmax.f32 %v1667, 0.0
      %v2563 = vmax.f32 %v2291, 0.0
      %v2564 = vmax.f32 %v2293, 0.0
      %v2565 = vmax.f32 %v1669, 0.0
      %v2566 = vmax.f32 %v1671, 0.0
      %v2567 = vmax.f32 %v2295, 0.0
      %v2568 = vmax.f32 %v2297, 0.0
      %v2569 = vmax.f32 %v1675, 0.0
      %v2570 = vmax.f32 %v1677, 0.0
      %v2571 = vmax.f32 %v2301, 0.0
      %v2572 = vmax.f32 %v2303, 0.0
      %v2573 = vmax.f32 %v1679, 0.0
      %v2574 = vmax.f32 %v1681, 0.0
      %v2575 = vmax.f32 %v2305, 0.0
      %v2576 = vmax.f32 %v2307, 0.0
      %v2577 = vmax.f32 %v1685, 0.0
      %v2578 = vmax.f32 %v1687, 0.0
      %v2579 = vmax.f32 %v2311, 0.0
      %v2580 = vmax.f32 %v2313, 0.0
      %v2581 = vmax.f32 %v1689, 0.0
      %v2582 = vmax.f32 %v1691, 0.0
      %v2583 = vmax.f32 %v2315, 0.0
      %v2584 = vmax.f32 %v2317, 0.0
      %v2585 = vmax.f32 %v1695, 0.0
      %v2586 = vmax.f32 %v1697, 0.0
      %v2587 = vmax.f32 %v2321, 0.0
      %v2588 = vmax.f32 %v2323, 0.0
      %v2589 = vmax.f32 %v1699, 0.0
      %v2590 = vmax.f32 %v1701, 0.0
      %v2591 = vmax.f32 %v2325, 0.0
      %v2592 = vmax.f32 %v2327, 0.0
      %v2593 = vmax.f32 %v1705, 0.0
      %v2594 = vmax.f32 %v1707, 0.0
      %v2595 = vmax.f32 %v2331, 0.0
      %v2596 = vmax.f32 %v2333, 0.0
      %v2597 = vmax.f32 %v1709, 0.0
      %v2598 = vmax.f32 %v1711, 0.0
      %v2599 = vmax.f32 %v2335, 0.0
      %v2600 = vmax.f32 %v2337, 0.0
      %v2601 = vmax.f32 %v1715, 0.0
      %v2602 = vmax.f32 %v1717, 0.0
      %v2603 = vmax.f32 %v2341, 0.0
      %v2604 = vmax.f32 %v2343, 0.0
      %v2605 = vmax.f32 %v1719, 0.0
      %v2606 = vmax.f32 %v1721, 0.0
      %v2607 = vmax.f32 %v2345, 0.0
      %v2608 = vmax.f32 %v2347, 0.0
      %v2609 = vmax.f32 %v1725, 0.0
      %v2610 = vmax.f32 %v1727, 0.0
      %v2611 = vmax.f32 %v2351, 0.0
      %v2612 = vmax.f32 %v2353, 0.0
      %v2613 = vmax.f32 %v1729, 0.0
      %v2614 = vmax.f32 %v1731, 0.0
      %v2615 = vmax.f32 %v2355, 0.0
      %v2616 = vmax.f32 %v2357, 0.0
      %v2617 = vmax.f32 %v1735, 0.0
      %v2618 = vmax.f32 %v1737, 0.0
      %v2619 = vmax.f32 %v2361, 0.0
      %v2620 = vmax.f32 %v2363, 0.0
      %v2621 = vmax.f32 %v1739, 0.0
      %v2622 = vmax.f32 %v1741, 0.0
      %v2623 = vmax.f32 %v2365, 0.0
      %v2624 = vmax.f32 %v2367, 0.0
      %v2625 = vmax.f32 %v1745, 0.0
      %v2626 = vmax.f32 %v1747, 0.0
      %v2627 = vmax.f32 %v2371, 0.0
      %v2628 = vmax.f32 %v2373, 0.0
      %v2629 = vmax.f32 %v1749, 0.0
      %v2630 = vmax.f32 %v1751, 0.0
      %v2631 = vmax.f32 %v2375, 0.0
      %v2632 = vmax.f32 %v2377, 0.0
      %v2633 = vmax.f32 %v1755, 0.0
      %v2634 = vmax.f32 %v1757, 0.0
      %v2635 = vmax.f32 %v2381, 0.0
      %v2636 = vmax.f32 %v2383, 0.0
      %v2637 = vmax.f32 %v1759, 0.0
      %v2638 = vmax.f32 %v1761, 0.0
      %v2639 = vmax.f32 %v2385, 0.0
      %v2640 = vmax.f32 %v2387, 0.0
      %v2641 = vmax.f32 %v1765, 0.0
      %v2642 = vmax.f32 %v1767, 0.0
      %v2643 = vmax.f32 %v2391, 0.0
      %v2644 = vmax.f32 %v2393, 0.0
      %v2645 = vmax.f32 %v1769, 0.0
      %v2646 = vmax.f32 %v1771, 0.0
      %v2647 = vmax.f32 %v2395, 0.0
      %v2648 = vmax.f32 %v2397, 0.0
      %v2649 = vmax.f32 %v1775, 0.0
      %v2650 = vmax.f32 %v1777, 0.0
      %v2651 = vmax.f32 %v2401, 0.0
      %v2652 = vmax.f32 %v2403, 0.0
      %v2653 = vmax.f32 %v1779, 0.0
      %v2654 = vmax.f32 %v1781, 0.0
      %v2655 = vmax.f32 %v2405, 0.0
      %v2656 = vmax.f32 %v2407, 0.0
      %v2657 = vmax.f32 %v1785, 0.0
      %v2658 = vmax.f32 %v1787, 0.0
      %v2659 = vmax.f32 %v2411, 0.0
      %v2660 = vmax.f32 %v2413, 0.0
      %v2661 = vmax.f32 %v1789, 0.0
      %v2662 = vmax.f32 %v1791, 0.0
      %v2663 = vmax.f32 %v2415, 0.0
      %v2664 = vmax.f32 %v2417, 0.0
      %v2665 = vmax.f32 %v1795, 0.0
      %v2666 = vmax.f32 %v1797, 0.0
      %v2667 = vmax.f32 %v2421, 0.0
      %v2668 = vmax.f32 %v2423, 0.0
      %v2669 = vmax.f32 %v1799, 0.0
      %v2670 = vmax.f32 %v1801, 0.0
      %v2671 = vmax.f32 %v2425, 0.0
      %v2672 = vmax.f32 %v2427, 0.0
      %v2673 = vmax.f32 %v1805, 0.0
      %v2674 = vmax.f32 %v1807, 0.0
      %v2675 = vmax.f32 %v2431, 0.0
      %v2676 = vmax.f32 %v2433, 0.0
      %v2677 = vmax.f32 %v1809, 0.0
      %v2678 = vmax.f32 %v1811, 0.0
      %v2679 = vmax.f32 %v2435, 0.0
      %v2680 = vmax.f32 %v2437, 0.0
      %v2681 = vmax.f32 %v1815, 0.0
      %v2682 = vmax.f32 %v1817, 0.0
      %v2683 = vmax.f32 %v2441, 0.0
      %v2684 = vmax.f32 %v2443, 0.0
      %v2685 = vmax.f32 %v1819, 0.0
      %v2686 = vmax.f32 %v1821, 0.0
      %v2687 = vmax.f32 %v2445, 0.0
      %v2688 = vmax.f32 %v2447, 0.0
      %v2689 = vmax.f32 %v1825, 0.0
      %v2690 = vmax.f32 %v1827, 0.0
      %v2691 = vmax.f32 %v2451, 0.0
      %v2692 = vmax.f32 %v2453, 0.0
      %v2693 = vmax.f32 %v1829, 0.0
      %v2694 = vmax.f32 %v1831, 0.0
      %v2695 = vmax.f32 %v2455, 0.0
      %v2696 = vmax.f32 %v2457, 0.0
      %v2697 = vmax.f32 %v1835, 0.0
      %v2698 = vmax.f32 %v1837, 0.0
      %v2699 = vmax.f32 %v2461, 0.0
      %v2700 = vmax.f32 %v2463, 0.0
      %v2701 = vmax.f32 %v1839, 0.0
      %v2702 = vmax.f32 %v1841, 0.0
      %v2703 = vmax.f32 %v2465, 0.0
      %v2704 = vmax.f32 %v2467, 0.0
      %v2705 = vmax.f32 %v1845, 0.0
      %v2706 = vmax.f32 %v1847, 0.0
      %v2707 = vmax.f32 %v2471, 0.0
      %v2708 = vmax.f32 %v2473, 0.0
      %v2709 = vmax.f32 %v1849, 0.0
      %v2710 = vmax.f32 %v1851, 0.0
      %v2711 = vmax.f32 %v2475, 0.0
      %v2712 = vmax.f32 %v2477, 0.0
      %v2713 = vmax.f32 %v1855, 0.0
      %v2714 = vmax.f32 %v1857, 0.0
      %v2715 = vmax.f32 %v2481, 0.0
      %v2716 = vmax.f32 %v2483, 0.0
      %v2717 = vmax.f32 %v1859, 0.0
      %v2718 = vmax.f32 %v1861, 0.0
      %v2719 = vmax.f32 %v2485, 0.0
      %v2720 = vmax.f32 %v2487, 0.0
      %v2721 = vmax.f32 %v1865, 0.0
      %v2722 = vmax.f32 %v1867, 0.0
      %v2723 = vmax.f32 %v2491, 0.0
      %v2724 = vmax.f32 %v2493, 0.0
      %v2725 = vmax.f32 %v1869, 0.0
      %v2726 = vmax.f32 %v1871, 0.0
      %v2727 = vmax.f32 %v2495, 0.0
      %v2728 = vmax.f32 %v2497, 0.0
      %v2729 = vmax.f32 %v1875, 0.0
      %v2730 = vmax.f32 %v1877, 0.0
      %v2731 = vmax.f32 %v2501, 0.0
      %v2732 = vmax.f32 %v2503, 0.0
      %v2733 = vmax.f32 %v1879, 0.0
      %v2734 = vmax.f32 %v1881, 0.0
      %v2735 = vmax.f32 %v2505, 0.0
      %v2736 = vmax.f32 %v2507, 0.0
      %v2737 = vmax.f32 %v1885, 0.0
      %v2738 = vmax.f32 %v1887, 0.0
      %v2739 = vmax.f32 %v2511, 0.0
      %v2740 = vmax.f32 %v2513, 0.0
      %v2741 = vmax.f32 %v1889, 0.0
      %v2742 = vmax.f32 %v1891, 0.0
      %v2743 = vmax.f32 %v2515, 0.0
      %v2744 = vmax.f32 %v2517, 0.0
      %v2745 = vmax.f32 %v1895, 0.0
      %v2746 = vmax.f32 %v1897, 0.0
      %v2747 = vmax.f32 %v2521, 0.0
      %v2748 = vmax.f32 %v2523, 0.0
      %v2749 = vmax.f32 %v1899, 0.0
      %v2750 = vmax.f32 %v1901, 0.0
      %v2751 = vmax.f32 %v2525, 0.0
      %v2752 = vmax.f32 %v2527, 0.0
      %v2753 = vadd.f32 %v2529, %v2533
      %v2754 = vadd.f32 %v2753, %v2537
      %v2755 = vadd.f32 %v2754, %v2541
      %v2756 = vadd.f32 %v2755, %v2545
      %v2757 = vadd.f32 %v2756, %v2549
      %v2758 = vadd.f32 %v2757, %v2553
      %v2759 = vrot.slane %v2758, 4
      %v2760 = vadd.f32 %v2758, %v2759
      %v2761 = vrot.slane %v2760, 2
      %v2762 = vadd.f32 %v2760, %v2761
      %v2763 = vrot.slane %v2762, 1
      %v2764 = vadd.f32 %v2762, %v2763
      %v2765 = vadd.f32 %v2530, %v2534
      %v2766 = vadd.f32 %v2765, %v2538
      %v2767 = vadd.f32 %v2766, %v2542
      %v2768 = vadd.f32 %v2767, %v2546
      %v2769 = vadd.f32 %v2768, %v2550
      %v2770 = vadd.f32 %v2769, %v2554
      %v2771 = vrot.slane %v2770, 4
      %v2772 = vadd.f32 %v2770, %v2771
      %v2773 = vrot.slane %v2772, 2
      %v2774 = vadd.f32 %v2772, %v2773
      %v2775 = vrot.slane %v2774, 1
      %v2776 = vadd.f32 %v2774, %v2775
      %v2777 = vadd.f32 %v2531, %v2535
      %v2778 = vadd.f32 %v2777, %v2539
      %v2779 = vadd.f32 %v2778, %v2543
      %v2780 = vadd.f32 %v2779, %v2547
      %v2781 = vadd.f32 %v2780, %v2551
      %v2782 = vadd.f32 %v2781, %v2555
      %v2783 = vrot.slane %v2782, 4
      %v2784 = vadd.f32 %v2782, %v2783
      %v2785 = vrot.slane %v2784, 2
      %v2786 = vadd.f32 %v2784, %v2785
      %v2787 = vrot.slane %v2786, 1
      %v2788 = vadd.f32 %v2786, %v2787
      %v2789 = vadd.f32 %v2532, %v2536
      %v2790 = vadd.f32 %v2789, %v2540
      %v2791 = vadd.f32 %v2790, %v2544
      %v2792 = vadd.f32 %v2791, %v2548
      %v2793 = vadd.f32 %v2792, %v2552
      %v2794 = vadd.f32 %v2793, %v2556
      %v2795 = vrot.slane %v2794, 4
      %v2796 = vadd.f32 %v2794, %v2795
      %v2797 = vrot.slane %v2796, 2
      %v2798 = vadd.f32 %v2796, %v2797
      %v2799 = vrot.slane %v2798, 1
      %v2800 = vadd.f32 %v2798, %v2799
      %v2801 = vadd.f32 %v2557, %v2561
      %v2802 = vadd.f32 %v2801, %v2565
      %v2803 = vadd.f32 %v2802, %v2569
      %v2804 = vadd.f32 %v2803, %v2573
      %v2805 = vadd.f32 %v2804, %v2577
      %v2806 = vadd.f32 %v2805, %v2581
      %v2807 = vrot.slane %v2806, 4
      %v2808 = vadd.f32 %v2806, %v2807
      %v2809 = vrot.slane %v2808, 2
      %v2810 = vadd.f32 %v2808, %v2809
      %v2811 = vrot.slane %v2810, 1
      %v2812 = vadd.f32 %v2810, %v2811
      %v2813 = vadd.f32 %v2558, %v2562
      %v2814 = vadd.f32 %v2813, %v2566
      %v2815 = vadd.f32 %v2814, %v2570
      %v2816 = vadd.f32 %v2815, %v2574
      %v2817 = vadd.f32 %v2816, %v2578
      %v2818 = vadd.f32 %v2817, %v2582
      %v2819 = vrot.slane %v2818, 4
      %v2820 = vadd.f32 %v2818, %v2819
      %v2821 = vrot.slane %v2820, 2
      %v2822 = vadd.f32 %v2820, %v2821
      %v2823 = vrot.slane %v2822, 1
      %v2824 = vadd.f32 %v2822, %v2823
      %v2825 = vadd.f32 %v2559, %v2563
      %v2826 = vadd.f32 %v2825, %v2567
      %v2827 = vadd.f32 %v2826, %v2571
      %v2828 = vadd.f32 %v2827, %v2575
      %v2829 = vadd.f32 %v2828, %v2579
      %v2830 = vadd.f32 %v2829, %v2583
      %v2831 = vrot.slane %v2830, 4
      %v2832 = vadd.f32 %v2830, %v2831
      %v2833 = vrot.slane %v2832, 2
      %v2834 = vadd.f32 %v2832, %v2833
      %v2835 = vrot.slane %v2834, 1
      %v2836 = vadd.f32 %v2834, %v2835
      %v2837 = vadd.f32 %v2560, %v2564
      %v2838 = vadd.f32 %v2837, %v2568
      %v2839 = vadd.f32 %v2838, %v2572
      %v2840 = vadd.f32 %v2839, %v2576
      %v2841 = vadd.f32 %v2840, %v2580
      %v2842 = vadd.f32 %v2841, %v2584
      %v2843 = vrot.slane %v2842, 4
      %v2844 = vadd.f32 %v2842, %v2843
      %v2845 = vrot.slane %v2844, 2
      %v2846 = vadd.f32 %v2844, %v2845
      %v2847 = vrot.slane %v2846, 1
      %v2848 = vadd.f32 %v2846, %v2847
      %v2849 = vadd.f32 %v2585, %v2589
      %v2850 = vadd.f32 %v2849, %v2593
      %v2851 = vadd.f32 %v2850, %v2597
      %v2852 = vadd.f32 %v2851, %v2601
      %v2853 = vadd.f32 %v2852, %v2605
      %v2854 = vadd.f32 %v2853, %v2609
      %v2855 = vrot.slane %v2854, 4
      %v2856 = vadd.f32 %v2854, %v2855
      %v2857 = vrot.slane %v2856, 2
      %v2858 = vadd.f32 %v2856, %v2857
      %v2859 = vrot.slane %v2858, 1
      %v2860 = vadd.f32 %v2858, %v2859
      %v2861 = vadd.f32 %v2586, %v2590
      %v2862 = vadd.f32 %v2861, %v2594
      %v2863 = vadd.f32 %v2862, %v2598
      %v2864 = vadd.f32 %v2863, %v2602
      %v2865 = vadd.f32 %v2864, %v2606
      %v2866 = vadd.f32 %v2865, %v2610
      %v2867 = vrot.slane %v2866, 4
      %v2868 = vadd.f32 %v2866, %v2867
      %v2869 = vrot.slane %v2868, 2
      %v2870 = vadd.f32 %v2868, %v2869
      %v2871 = vrot.slane %v2870, 1
      %v2872 = vadd.f32 %v2870, %v2871
      %v2873 = vadd.f32 %v2587, %v2591
      %v2874 = vadd.f32 %v2873, %v2595
      %v2875 = vadd.f32 %v2874, %v2599
      %v2876 = vadd.f32 %v2875, %v2603
      %v2877 = vadd.f32 %v2876, %v2607
      %v2878 = vadd.f32 %v2877, %v2611
      %v2879 = vrot.slane %v2878, 4
      %v2880 = vadd.f32 %v2878, %v2879
      %v2881 = vrot.slane %v2880, 2
      %v2882 = vadd.f32 %v2880, %v2881
      %v2883 = vrot.slane %v2882, 1
      %v2884 = vadd.f32 %v2882, %v2883
      %v2885 = vadd.f32 %v2588, %v2592
      %v2886 = vadd.f32 %v2885, %v2596
      %v2887 = vadd.f32 %v2886, %v2600
      %v2888 = vadd.f32 %v2887, %v2604
      %v2889 = vadd.f32 %v2888, %v2608
      %v2890 = vadd.f32 %v2889, %v2612
      %v2891 = vrot.slane %v2890, 4
      %v2892 = vadd.f32 %v2890, %v2891
      %v2893 = vrot.slane %v2892, 2
      %v2894 = vadd.f32 %v2892, %v2893
      %v2895 = vrot.slane %v2894, 1
      %v2896 = vadd.f32 %v2894, %v2895
      %v2897 = vadd.f32 %v2613, %v2617
      %v2898 = vadd.f32 %v2897, %v2621
      %v2899 = vadd.f32 %v2898, %v2625
      %v2900 = vadd.f32 %v2899, %v2629
      %v2901 = vadd.f32 %v2900, %v2633
      %v2902 = vadd.f32 %v2901, %v2637
      %v2903 = vrot.slane %v2902, 4
      %v2904 = vadd.f32 %v2902, %v2903
      %v2905 = vrot.slane %v2904, 2
      %v2906 = vadd.f32 %v2904, %v2905
      %v2907 = vrot.slane %v2906, 1
      %v2908 = vadd.f32 %v2906, %v2907
      %v2909 = vadd.f32 %v2614, %v2618
      %v2910 = vadd.f32 %v2909, %v2622
      %v2911 = vadd.f32 %v2910, %v2626
      %v2912 = vadd.f32 %v2911, %v2630
      %v2913 = vadd.f32 %v2912, %v2634
      %v2914 = vadd.f32 %v2913, %v2638
      %v2915 = vrot.slane %v2914, 4
      %v2916 = vadd.f32 %v2914, %v2915
      %v2917 = vrot.slane %v2916, 2
      %v2918 = vadd.f32 %v2916, %v2917
      %v2919 = vrot.slane %v2918, 1
      %v2920 = vadd.f32 %v2918, %v2919
      %v2921 = vadd.f32 %v2615, %v2619
      %v2922 = vadd.f32 %v2921, %v2623
      %v2923 = vadd.f32 %v2922, %v2627
      %v2924 = vadd.f32 %v2923, %v2631
      %v2925 = vadd.f32 %v2924, %v2635
      %v2926 = vadd.f32 %v2925, %v2639
      %v2927 = vrot.slane %v2926, 4
      %v2928 = vadd.f32 %v2926, %v2927
      %v2929 = vrot.slane %v2928, 2
      %v2930 = vadd.f32 %v2928, %v2929
      %v2931 = vrot.slane %v2930, 1
      %v2932 = vadd.f32 %v2930, %v2931
      %v2933 = vadd.f32 %v2616, %v2620
      %v2934 = vadd.f32 %v2933, %v2624
      %v2935 = vadd.f32 %v2934, %v2628
      %v2936 = vadd.f32 %v2935, %v2632
      %v2937 = vadd.f32 %v2936, %v2636
      %v2938 = vadd.f32 %v2937, %v2640
      %v2939 = vrot.slane %v2938, 4
      %v2940 = vadd.f32 %v2938, %v2939
      %v2941 = vrot.slane %v2940, 2
      %v2942 = vadd.f32 %v2940, %v2941
      %v2943 = vrot.slane %v2942, 1
      %v2944 = vadd.f32 %v2942, %v2943
      %v2945 = vadd.f32 %v2641, %v2645
      %v2946 = vadd.f32 %v2945, %v2649
      %v2947 = vadd.f32 %v2946, %v2653
      %v2948 = vadd.f32 %v2947, %v2657
      %v2949 = vadd.f32 %v2948, %v2661
      %v2950 = vadd.f32 %v2949, %v2665
      %v2951 = vrot.slane %v2950, 4
      %v2952 = vadd.f32 %v2950, %v2951
      %v2953 = vrot.slane %v2952, 2
      %v2954 = vadd.f32 %v2952, %v2953
      %v2955 = vrot.slane %v2954, 1
      %v2956 = vadd.f32 %v2954, %v2955
      %v2957 = vadd.f32 %v2642, %v2646
      %v2958 = vadd.f32 %v2957, %v2650
      %v2959 = vadd.f32 %v2958, %v2654
      %v2960 = vadd.f32 %v2959, %v2658
      %v2961 = vadd.f32 %v2960, %v2662
      %v2962 = vadd.f32 %v2961, %v2666
      %v2963 = vrot.slane %v2962, 4
      %v2964 = vadd.f32 %v2962, %v2963
      %v2965 = vrot.slane %v2964, 2
      %v2966 = vadd.f32 %v2964, %v2965
      %v2967 = vrot.slane %v2966, 1
      %v2968 = vadd.f32 %v2966, %v2967
      %v2969 = vadd.f32 %v2643, %v2647
      %v2970 = vadd.f32 %v2969, %v2651
      %v2971 = vadd.f32 %v2970, %v2655
      %v2972 = vadd.f32 %v2971, %v2659
      %v2973 = vadd.f32 %v2972, %v2663
      %v2974 = vadd.f32 %v2973, %v2667
      %v2975 = vrot.slane %v2974, 4
      %v2976 = vadd.f32 %v2974, %v2975
      %v2977 = vrot.slane %v2976, 2
      %v2978 = vadd.f32 %v2976, %v2977
      %v2979 = vrot.slane %v2978, 1
      %v2980 = vadd.f32 %v2978, %v2979
      %v2981 = vadd.f32 %v2644, %v2648
      %v2982 = vadd.f32 %v2981, %v2652
      %v2983 = vadd.f32 %v2982, %v2656
      %v2984 = vadd.f32 %v2983, %v2660
      %v2985 = vadd.f32 %v2984, %v2664
      %v2986 = vadd.f32 %v2985, %v2668
      %v2987 = vrot.slane %v2986, 4
      %v2988 = vadd.f32 %v2986, %v2987
      %v2989 = vrot.slane %v2988, 2
      %v2990 = vadd.f32 %v2988, %v2989
      %v2991 = vrot.slane %v2990, 1
      %v2992 = vadd.f32 %v2990, %v2991
      %v2993 = vadd.f32 %v2669, %v2673
      %v2994 = vadd.f32 %v2993, %v2677
      %v2995 = vadd.f32 %v2994, %v2681
      %v2996 = vadd.f32 %v2995, %v2685
      %v2997 = vadd.f32 %v2996, %v2689
      %v2998 = vadd.f32 %v2997, %v2693
      %v2999 = vrot.slane %v2998, 4
      %v3000 = vadd.f32 %v2998, %v2999
      %v3001 = vrot.slane %v3000, 2
      %v3002 = vadd.f32 %v3000, %v3001
      %v3003 = vrot.slane %v3002, 1
      %v3004 = vadd.f32 %v3002, %v3003
      %v3005 = vadd.f32 %v2670, %v2674
      %v3006 = vadd.f32 %v3005, %v2678
      %v3007 = vadd.f32 %v3006, %v2682
      %v3008 = vadd.f32 %v3007, %v2686
      %v3009 = vadd.f32 %v3008, %v2690
      %v3010 = vadd.f32 %v3009, %v2694
      %v3011 = vrot.slane %v3010, 4
      %v3012 = vadd.f32 %v3010, %v3011
      %v3013 = vrot.slane %v3012, 2
      %v3014 = vadd.f32 %v3012, %v3013
      %v3015 = vrot.slane %v3014, 1
      %v3016 = vadd.f32 %v3014, %v3015
      %v3017 = vadd.f32 %v2671, %v2675
      %v3018 = vadd.f32 %v3017, %v2679
      %v3019 = vadd.f32 %v3018, %v2683
      %v3020 = vadd.f32 %v3019, %v2687
      %v3021 = vadd.f32 %v3020, %v2691
      %v3022 = vadd.f32 %v3021, %v2695
      %v3023 = vrot.slane %v3022, 4
      %v3024 = vadd.f32 %v3022, %v3023
      %v3025 = vrot.slane %v3024, 2
      %v3026 = vadd.f32 %v3024, %v3025
      %v3027 = vrot.slane %v3026, 1
      %v3028 = vadd.f32 %v3026, %v3027
      %v3029 = vadd.f32 %v2672, %v2676
      %v3030 = vadd.f32 %v3029, %v2680
      %v3031 = vadd.f32 %v3030, %v2684
      %v3032 = vadd.f32 %v3031, %v2688
      %v3033 = vadd.f32 %v3032, %v2692
      %v3034 = vadd.f32 %v3033, %v2696
      %v3035 = vrot.slane %v3034, 4
      %v3036 = vadd.f32 %v3034, %v3035
      %v3037 = vrot.slane %v3036, 2
      %v3038 = vadd.f32 %v3036, %v3037
      %v3039 = vrot.slane %v3038, 1
      %v3040 = vadd.f32 %v3038, %v3039
      %v3041 = vadd.f32 %v2697, %v2701
      %v3042 = vadd.f32 %v3041, %v2705
      %v3043 = vadd.f32 %v3042, %v2709
      %v3044 = vadd.f32 %v3043, %v2713
      %v3045 = vadd.f32 %v3044, %v2717
      %v3046 = vadd.f32 %v3045, %v2721
      %v3047 = vrot.slane %v3046, 4
      %v3048 = vadd.f32 %v3046, %v3047
      %v3049 = vrot.slane %v3048, 2
      %v3050 = vadd.f32 %v3048, %v3049
      %v3051 = vrot.slane %v3050, 1
      %v3052 = vadd.f32 %v3050, %v3051
      %v3053 = vadd.f32 %v2698, %v2702
      %v3054 = vadd.f32 %v3053, %v2706
      %v3055 = vadd.f32 %v3054, %v2710
      %v3056 = vadd.f32 %v3055, %v2714
      %v3057 = vadd.f32 %v3056, %v2718
      %v3058 = vadd.f32 %v3057, %v2722
      %v3059 = vrot.slane %v3058, 4
      %v3060 = vadd.f32 %v3058, %v3059
      %v3061 = vrot.slane %v3060, 2
      %v3062 = vadd.f32 %v3060, %v3061
      %v3063 = vrot.slane %v3062, 1
      %v3064 = vadd.f32 %v3062, %v3063
      %v3065 = vadd.f32 %v2699, %v2703
      %v3066 = vadd.f32 %v3065, %v2707
      %v3067 = vadd.f32 %v3066, %v2711
      %v3068 = vadd.f32 %v3067, %v2715
      %v3069 = vadd.f32 %v3068, %v2719
      %v3070 = vadd.f32 %v3069, %v2723
      %v3071 = vrot.slane %v3070, 4
      %v3072 = vadd.f32 %v3070, %v3071
      %v3073 = vrot.slane %v3072, 2
      %v3074 = vadd.f32 %v3072, %v3073
      %v3075 = vrot.slane %v3074, 1
      %v3076 = vadd.f32 %v3074, %v3075
      %v3077 = vadd.f32 %v2700, %v2704
      %v3078 = vadd.f32 %v3077, %v2708
      %v3079 = vadd.f32 %v3078, %v2712
      %v3080 = vadd.f32 %v3079, %v2716
      %v3081 = vadd.f32 %v3080, %v2720
      %v3082 = vadd.f32 %v3081, %v2724
      %v3083 = vrot.slane %v3082, 4
      %v3084 = vadd.f32 %v3082, %v3083
      %v3085 = vrot.slane %v3084, 2
      %v3086 = vadd.f32 %v3084, %v3085
      %v3087 = vrot.slane %v3086, 1
      %v3088 = vadd.f32 %v3086, %v3087
      %v3089 = vadd.f32 %v2725, %v2729
      %v3090 = vadd.f32 %v3089, %v2733
      %v3091 = vadd.f32 %v3090, %v2737
      %v3092 = vadd.f32 %v3091, %v2741
      %v3093 = vadd.f32 %v3092, %v2745
      %v3094 = vadd.f32 %v3093, %v2749
      %v3095 = vrot.slane %v3094, 4
      %v3096 = vadd.f32 %v3094, %v3095
      %v3097 = vrot.slane %v3096, 2
      %v3098 = vadd.f32 %v3096, %v3097
      %v3099 = vrot.slane %v3098, 1
      %v3100 = vadd.f32 %v3098, %v3099
      %v3101 = vadd.f32 %v2726, %v2730
      %v3102 = vadd.f32 %v3101, %v2734
      %v3103 = vadd.f32 %v3102, %v2738
      %v3104 = vadd.f32 %v3103, %v2742
      %v3105 = vadd.f32 %v3104, %v2746
      %v3106 = vadd.f32 %v3105, %v2750
      %v3107 = vrot.slane %v3106, 4
      %v3108 = vadd.f32 %v3106, %v3107
      %v3109 = vrot.slane %v3108, 2
      %v3110 = vadd.f32 %v3108, %v3109
      %v3111 = vrot.slane %v3110, 1
      %v3112 = vadd.f32 %v3110, %v3111
      %v3113 = vadd.f32 %v2727, %v2731
      %v3114 = vadd.f32 %v3113, %v2735
      %v3115 = vadd.f32 %v3114, %v2739
      %v3116 = vadd.f32 %v3115, %v2743
      %v3117 = vadd.f32 %v3116, %v2747
      %v3118 = vadd.f32 %v3117, %v2751
      %v3119 = vrot.slane %v3118, 4
      %v3120 = vadd.f32 %v3118, %v3119
      %v3121 = vrot.slane %v3120, 2
      %v3122 = vadd.f32 %v3120, %v3121
      %v3123 = vrot.slane %v3122, 1
      %v3124 = vadd.f32 %v3122, %v3123
      %v3125 = vadd.f32 %v2728, %v2732
      %v3126 = vadd.f32 %v3125, %v2736
      %v3127 = vadd.f32 %v3126, %v2740
      %v3128 = vadd.f32 %v3127, %v2744
      %v3129 = vadd.f32 %v3128, %v2748
      %v3130 = vadd.f32 %v3129, %v2752
      %v3131 = vrot.slane %v3130, 4
      %v3132 = vadd.f32 %v3130, %v3131
      %v3133 = vrot.slane %v3132, 2
      %v3134 = vadd.f32 %v3132, %v3133
      %v3135 = vrot.slane %v3134, 1
      %v3136 = vadd.f32 %v3134, %v3135
      %vm3169 = vcmask 1041409
      %v3170 = vsel %vm3169, %v2812, %v2764
      %vm3171 = vcmask 1042434
      %v3172 = vsel %vm3171, %v2860, %v3170
      %vm3173 = vcmask 1043459
      %v3174 = vsel %vm3173, %v2908, %v3172
      %vm3175 = vcmask 1044484
      %v3176 = vsel %vm3175, %v2956, %v3174
      %vm3177 = vcmask 1045509
      %v3178 = vsel %vm3177, %v3004, %v3176
      %vm3179 = vcmask 1046534
      %v3180 = vsel %vm3179, %v3052, %v3178
      %vm3181 = vcmask 1047559
      %v3182 = vsel %vm3181, %v3100, %v3180
      %v3183 = vsel %vm3169, %v2824, %v2776
      %v3184 = vsel %vm3171, %v2872, %v3183
      %v3185 = vsel %vm3173, %v2920, %v3184
      %v3186 = vsel %vm3175, %v2968, %v3185
      %v3187 = vsel %vm3177, %v3016, %v3186
      %v3188 = vsel %vm3179, %v3064, %v3187
      %v3189 = vsel %vm3181, %v3112, %v3188
      %v3190 = vsel %vm3169, %v2836, %v2788
      %v3191 = vsel %vm3171, %v2884, %v3190
      %v3192 = vsel %vm3173, %v2932, %v3191
      %v3193 = vsel %vm3175, %v2980, %v3192
      %v3194 = vsel %vm3177, %v3028, %v3193
      %v3195 = vsel %vm3179, %v3076, %v3194
      %v3196 = vsel %vm3181, %v3124, %v3195
      %v3197 = vsel %vm3169, %v2848, %v2800
      %v3198 = vsel %vm3171, %v2896, %v3197
      %v3199 = vsel %vm3173, %v2944, %v3198
      %v3200 = vsel %vm3175, %v2992, %v3199
      %v3201 = vsel %vm3177, %v3040, %v3200
      %v3202 = vsel %vm3179, %v3088, %v3201
      %v3203 = vsel %vm3181, %v3136, %v3202
      %3208 = vst [vmem:[#allocation2] sm:$0xff] %v3182
      %3209 = vst [vmem:[#allocation2 + $0x8] sm:$0xff] %v3189
      %3210 = vst [vmem:[#allocation2 + $0x10] sm:$0xff] %v3196
      %3211 = vst [vmem:[#allocation2 + $0x18] sm:$0xff] %v3203
      %v3212 = vld [vmem:[#allocation2] sm:$0xff]
      %v3213 = vld [vmem:[#allocation2 + $0x8] sm:$0xff]
      %v3214 = vld [vmem:[#allocation2 + $0x10] sm:$0xff]
      %v3215 = vld [vmem:[#allocation2 + $0x18] sm:$0xff]
      %v3216 = vld [vmem:[%s3] sm:$0xff]
      %v3217 = vld [vmem:[%s3 + $0x8] sm:$0xff]
      %v3218 = vld [vmem:[%s3 + $0x10] sm:$0xff]
      %v3219 = vld [vmem:[%s3 + $0x18] sm:$0xff]
      %v3220 = vld [vmem:[%s3 + $0x20] sm:$0xff]
      %v3221 = vld [vmem:[%s3 + $0x28] sm:$0xff]
      %v3222 = vld [vmem:[%s3 + $0x30] sm:$0xff]
      %v3223 = vld [vmem:[%s3 + $0x38] sm:$0xff]
      %v3224 = vld [vmem:[%s3 + $0x40] sm:$0xff]
      %v3225 = vld [vmem:[%s3 + $0x48] sm:$0xff]
      %v3226 = vld [vmem:[%s3 + $0x50] sm:$0xff]
      %v3227 = vld [vmem:[%s3 + $0x58] sm:$0xff]
      %v3228 = vld [vmem:[%s3 + $0x60] sm:$0xff]
      %v3229 = vld [vmem:[%s3 + $0x68] sm:$0xff]
      %v3230 = vld [vmem:[%s3 + $0x70] sm:$0xff]
      %v3231 = vld [vmem:[%s3 + $0x78] sm:$0xff]
      %v3232 = vld [vmem:[%s3 + $0x80] sm:$0xff]
      %v3233 = vld [vmem:[%s3 + $0x88] sm:$0xff]
      %v3234 = vld [vmem:[%s3 + $0x90] sm:$0xff]
      %v3235 = vld [vmem:[%s3 + $0x98] sm:$0xff]
      %v3236 = vld [vmem:[%s3 + $0xa0] sm:$0xff]
      %v3237 = vld [vmem:[%s3 + $0xa8] sm:$0xff]
      %v3238 = vld [vmem:[%s3 + $0xb0] sm:$0xff]
      %v3239 = vld [vmem:[%s3 + $0xb8] sm:$0xff]
      %v3240 = vld [vmem:[%s3 + $0xc0] sm:$0xff]
      %v3241 = vld [vmem:[%s3 + $0xc8] sm:$0xff]
      %v3242 = vld [vmem:[%s3 + $0xd0] sm:$0xff]
      %v3243 = vld [vmem:[%s3 + $0xd8] sm:$0xff]
      %v3244 = vld [vmem:[%s3 + $0xe0] sm:$0xff]
      %v3245 = vld [vmem:[%s3 + $0xe8] sm:$0xff]
      %v3246 = vld [vmem:[%s3 + $0xf0] sm:$0xff]
      %v3247 = vld [vmem:[%s3 + $0xf8] sm:$0xff]
      %v3248 = vld [vmem:[%s3 + $0x100] sm:$0xff]
      %v3249 = vld [vmem:[%s3 + $0x108] sm:$0xff]
      %v3250 = vld [vmem:[%s3 + $0x110] sm:$0xff]
      %v3251 = vld [vmem:[%s3 + $0x118] sm:$0xff]
      %v3252 = vld [vmem:[%s3 + $0x120] sm:$0xff]
      %v3253 = vld [vmem:[%s3 + $0x128] sm:$0xff]
      %v3254 = vld [vmem:[%s3 + $0x130] sm:$0xff]
      %v3255 = vld [vmem:[%s3 + $0x138] sm:$0xff]
      %v3256 = vld [vmem:[%s3 + $0x140] sm:$0xff]
      %v3257 = vld [vmem:[%s3 + $0x148] sm:$0xff]
      %v3258 = vld [vmem:[%s3 + $0x150] sm:$0xff]
      %v3259 = vld [vmem:[%s3 + $0x158] sm:$0xff]
      %v3260 = vld [vmem:[%s3 + $0x160] sm:$0xff]
      %v3261 = vld [vmem:[%s3 + $0x168] sm:$0xff]
      %v3262 = vld [vmem:[%s3 + $0x170] sm:$0xff]
      %v3263 = vld [vmem:[%s3 + $0x178] sm:$0xff]
      %v3264 = vld [vmem:[%s3 + $0x180] sm:$0xff]
      %v3265 = vld [vmem:[%s3 + $0x188] sm:$0xff]
      %v3266 = vld [vmem:[%s3 + $0x190] sm:$0xff]
      %v3267 = vld [vmem:[%s3 + $0x198] sm:$0xff]
      %v3268 = vld [vmem:[%s3 + $0x1a0] sm:$0xff]
      %v3269 = vld [vmem:[%s3 + $0x1a8] sm:$0xff]
      %v3270 = vld [vmem:[%s3 + $0x1b0] sm:$0xff]
      %v3271 = vld [vmem:[%s3 + $0x1b8] sm:$0xff]
      %v3272 = vld [vmem:[%s3 + $0x1c0] sm:$0xff]
      %v3273 = vld [vmem:[%s3 + $0x1c8] sm:$0xff]
      %v3274 = vld [vmem:[%s3 + $0x1d0] sm:$0xff]
      %v3275 = vld [vmem:[%s3 + $0x1d8] sm:$0xff]
      %v3276 = vld [vmem:[%s3 + $0x1e0] sm:$0xff]
      %v3277 = vld [vmem:[%s3 + $0x1e8] sm:$0xff]
      %v3278 = vld [vmem:[%s3 + $0x1f0] sm:$0xff]
      %v3279 = vld [vmem:[%s3 + $0x1f8] sm:$0xff]
      %v3280 = vld [vmem:[%s4] sm:$0x1]
      %v3282 = vlaneseq
      %v3283 = vshrl.u32 %v3282, 7
      %v3284 = vsub.s32 0, %v3283
      %v3285 = vrot.slane %v3280, %v3284
      %3287 = vmatprep.subr.mxu0 0.0
      %3288 = vmatpush1.msra.mxu0 %v3231
      %3289 = vmatprep.subr.mxu0 0.0
      %3290 = vmatpush1.msra.mxu0 %v3230
      %3291 = vmatprep.subr.mxu0 0.0
      %3292 = vmatpush1.msra.mxu0 %v3229
      %3293 = vmatprep.subr.mxu0 0.0
      %3294 = vmatpush1.msra.mxu0 %v3228
      %3295 = vmatprep.subr.mxu0 0.0
      %3296 = vmatpush1.msra.mxu0 %v3227
      %3297 = vmatprep.subr.mxu0 0.0
      %3298 = vmatpush1.msra.mxu0 %v3226
      %3299 = vmatprep.subr.mxu0 0.0
      %3300 = vmatpush1.msra.mxu0 %v3225
      %3301 = vmatprep.subr.mxu0 0.0
      %3302 = vmatpush1.msra.mxu0 %v3224
      %3303 = vmatprep.subr.mxu0 0.0
      %3304 = vmatpush1.msra.mxu0 %v3223
      %3305 = vmatprep.subr.mxu0 0.0
      %3306 = vmatpush1.msra.mxu0 %v3222
      %3307 = vmatprep.subr.mxu0 0.0
      %3308 = vmatpush1.msra.mxu0 %v3221
      %3309 = vmatprep.subr.mxu0 0.0
      %3310 = vmatpush1.msra.mxu0 %v3220
      %3311 = vmatprep.subr.mxu0 0.0
      %3312 = vmatpush1.msra.mxu0 %v3219
      %3313 = vmatprep.subr.mxu0 0.0
      %3314 = vmatpush1.msra.mxu0 %v3218
      %3315 = vmatprep.subr.mxu0 0.0
      %3316 = vmatpush1.msra.mxu0 %v3217
      %3317 = vmatprep.subr.mxu0 0.0
      %3318 = vmatpush1.msra.mxu0 %v3216
      %3319 = vmatprep.subr.mxu0 0.0
      %3320 = vmatpush2.msra.mxu0 %v3247
      %3321 = vmatprep.subr.mxu0 0.0
      %3322 = vmatpush2.msra.mxu0 %v3246
      %3323 = vmatprep.subr.mxu0 0.0
      %3324 = vmatpush2.msra.mxu0 %v3245
      %3325 = vmatprep.subr.mxu0 0.0
      %3326 = vmatpush2.msra.mxu0 %v3244
      %3327 = vmatprep.subr.mxu0 0.0
      %3328 = vmatpush2.msra.mxu0 %v3243
      %3329 = vmatprep.subr.mxu0 0.0
      %3330 = vmatpush2.msra.mxu0 %v3242
      %3331 = vmatprep.subr.mxu0 0.0
      %3332 = vmatpush2.msra.mxu0 %v3241
      %3333 = vmatprep.subr.mxu0 0.0
      %3334 = vmatpush2.msra.mxu0 %v3240
      %3335 = vmatprep.subr.mxu0 0.0
      %3336 = vmatpush2.msra.mxu0 %v3239
      %3337 = vmatprep.subr.mxu0 0.0
      %3338 = vmatpush2.msra.mxu0 %v3238
      %3339 = vmatprep.subr.mxu0 0.0
      %3340 = vmatpush2.msra.mxu0 %v3237
      %3341 = vmatprep.subr.mxu0 0.0
      %3342 = vmatpush2.msra.mxu0 %v3236
      %3343 = vmatprep.subr.mxu0 0.0
      %3344 = vmatpush2.msra.mxu0 %v3235
      %3345 = vmatprep.subr.mxu0 0.0
      %3346 = vmatpush2.msra.mxu0 %v3234
      %3347 = vmatprep.subr.mxu0 0.0
      %3348 = vmatpush2.msra.mxu0 %v3233
      %3349 = vmatprep.subr.mxu0 0.0
      %3350 = vmatpush2.msra.mxu0 %v3232
      %3351 = vmatprep.mubr.f32.mxu0 %v3213
      %3352 = vmatmul.mubr.f32.gmra.mxu0 %v3212
      %v3353 = vpop.f32.mrf.mxu0
      %v3354 = vadd.f32 %v3285, %v3353
      %v3355 = vpop.f32.mrf.mxu0
      %3356 = vdwg.mxu0
      %3357 = vmatprep.subr.mxu0 0.0
      %3358 = vmatpush1.msra.mxu0 %v3263
      %3359 = vmatprep.subr.mxu0 0.0
      %3360 = vmatpush1.msra.mxu0 %v3262
      %3361 = vmatprep.subr.mxu0 0.0
      %3362 = vmatpush1.msra.mxu0 %v3261
      %3363 = vmatprep.subr.mxu0 0.0
      %3364 = vmatpush1.msra.mxu0 %v3260
      %3365 = vmatprep.subr.mxu0 0.0
      %3366 = vmatpush1.msra.mxu0 %v3259
      %3367 = vmatprep.subr.mxu0 0.0
      %3368 = vmatpush1.msra.mxu0 %v3258
      %3369 = vmatprep.subr.mxu0 0.0
      %3370 = vmatpush1.msra.mxu0 %v3257
      %3371 = vmatprep.subr.mxu0 0.0
      %3372 = vmatpush1.msra.mxu0 %v3256
      %3373 = vmatprep.subr.mxu0 0.0
      %3374 = vmatpush1.msra.mxu0 %v3255
      %3375 = vmatprep.subr.mxu0 0.0
      %3376 = vmatpush1.msra.mxu0 %v3254
      %3377 = vmatprep.subr.mxu0 0.0
      %3378 = vmatpush1.msra.mxu0 %v3253
      %3379 = vmatprep.subr.mxu0 0.0
      %3380 = vmatpush1.msra.mxu0 %v3252
      %3381 = vmatprep.subr.mxu0 0.0
      %3382 = vmatpush1.msra.mxu0 %v3251
      %3383 = vmatprep.subr.mxu0 0.0
      %3384 = vmatpush1.msra.mxu0 %v3250
      %3385 = vmatprep.subr.mxu0 0.0
      %3386 = vmatpush1.msra.mxu0 %v3249
      %3387 = vmatprep.subr.mxu0 0.0
      %3388 = vmatpush1.msra.mxu0 %v3248
      %3389 = vmatprep.subr.mxu0 0.0
      %3390 = vmatpush2.msra.mxu0 %v3279
      %3391 = vmatprep.subr.mxu0 0.0
      %3392 = vmatpush2.msra.mxu0 %v3278
      %3393 = vmatprep.subr.mxu0 0.0
      %3394 = vmatpush2.msra.mxu0 %v3277
      %3395 = vmatprep.subr.mxu0 0.0
      %3396 = vmatpush2.msra.mxu0 %v3276
      %3397 = vmatprep.subr.mxu0 0.0
      %3398 = vmatpush2.msra.mxu0 %v3275
      %3399 = vmatprep.subr.mxu0 0.0
      %3400 = vmatpush2.msra.mxu0 %v3274
      %3401 = vmatprep.subr.mxu0 0.0
      %3402 = vmatpush2.msra.mxu0 %v3273
      %3403 = vmatprep.subr.mxu0 0.0
      %3404 = vmatpush2.msra.mxu0 %v3272
      %3405 = vmatprep.subr.mxu0 0.0
      %3406 = vmatpush2.msra.mxu0 %v3271
      %3407 = vmatprep.subr.mxu0 0.0
      %3408 = vmatpush2.msra.mxu0 %v3270
      %3409 = vmatprep.subr.mxu0 0.0
      %3410 = vmatpush2.msra.mxu0 %v3269
      %3411 = vmatprep.subr.mxu0 0.0
      %3412 = vmatpush2.msra.mxu0 %v3268
      %3413 = vmatprep.subr.mxu0 0.0
      %3414 = vmatpush2.msra.mxu0 %v3267
      %3415 = vmatprep.subr.mxu0 0.0
      %3416 = vmatpush2.msra.mxu0 %v3266
      %3417 = vmatprep.subr.mxu0 0.0
      %3418 = vmatpush2.msra.mxu0 %v3265
      %3419 = vmatprep.subr.mxu0 0.0
      %3420 = vmatpush2.msra.mxu0 %v3264
      %3421 = vmatprep.mubr.f32.mxu0 %v3215
      %3422 = vmatmul.mubr.f32.gmra.mxu0 %v3214
      %v3423 = vpop.f32.mrf.mxu0
      %v3424 = vadd.f32 %v3354, %v3423
      %v3425 = vpop.f32.mrf.mxu0
      %3426 = vdwg.mxu0
      %3427 = vst [vmem:[%s227] sm:$0xff] %v3424
      %p3428 = scmp.lt.s32.totalorder %s16, 1
      %s3429 = scalar_select %p3428, %s16, 1
      %s3430 = smul.addr %s3429, 8
      %s3431 = scalar_lea.vmem %s5, %s3430
      // Predicated region
      $region41: #{mixnet_head_forward.1} parent=39 // pred_check
        %p3432 = pneg %p144
      $region42: #{mixnet_head_forward.1} parent=39 // pred_check_branch
        %3434 = sbr.rel (%p3432) target = $region44
      $region43: #{mixnet_head_forward.1} parent=39 // pred_region
        _
      $region44: #{mixnet_head_forward.1} parent=39 // pred_fallthru
        _
    $region40: #{mixnet_head_forward.1} parent=5 // pred_fallthru
      _
    %p3435 = scmp.le.s32.totalorder 2, %s11
    // Predicated region
    $region45: #{mixnet_head_forward.1} parent=5 // pred_check
      %p3436 = pneg %p3435
    $region46: #{mixnet_head_forward.1} parent=5 // pred_check_branch
      %3438 = sbr.rel (%p3436) target = $region48
    $region47: #{mixnet_head_forward.1} parent=5 // pred_region
      %s3439 = ssub.s32 %s11, 2
      // Predicated region
      $region49: #{mixnet_head_forward.1} parent=47 // pred_check
        %p3440 = pneg %p150
      $region50: #{mixnet_head_forward.1} parent=47 // pred_check_branch
        %3442 = sbr.rel (%p3440) target = $region52
      $region51: #{mixnet_head_forward.1} parent=47 // pred_region
        %p3443 = scmp.lt.s32.totalorder %s17, 1
        %s3444 = scalar_select %p3443, %s17, 1
        %s3445 = smul.addr %s3444, 8
        %s3446 = scalar_lea.vmem %s5, %s3445
      $region52: #{mixnet_head_forward.1} parent=47 // pred_fallthru
        _
    $region48: #{mixnet_head_forward.1} parent=5 // pred_fallthru
      _
  $region6: #{mixnet_head_forward.1} parent=0 // loop_footer
    %s15 = sadd.s32 1, %s11
  $region7: #{mixnet_head_forward.1} parent=0 // loop_footer_branch
    %10 = sbr.rel target = $region3
  $region8: #{mixnet_head_forward.1} parent=0 // loop_exit
    _

</llo_original>
